<compile_context>
chip_gen: v6e
topology: v6e:2x2x1
jax: 0.10.0
libtpu: 0.0.40
codegen_flags: <defaults>
</compile_context>

<pallas_src>
import functools

import jax
import jax.numpy as jnp
from jax import lax
from jax.experimental import pallas as pl
from jax.experimental.pallas import tpu as pltpu


def _downsample_kernel(x_ref, halo_ref, wa_ref, wb_ref, bias_ref, o_ref,
                       *, img_rows, has_halo):
    """One grid step: M = GR*Wo output pixels x TN output channels.

    x_ref    : (GR, 2, Wo, C2)  GR input row-pairs; stride-2 column pair packed in lanes
    halo_ref : (1, 1, Wo, C2)   odd sub-row of the row-pair just above this tile
    wa_ref   : (3, C2, TN)      per-ky [w(kx=1); w(kx=2)] stacked along K (bf16)
    wb_ref   : (3, Kb, TN)      per-ky w(kx=0); Kb = Cin (aligned lane slice) or C2
                                (zero-padded K when Cin % 128 != 0)
    bias_ref : (1, TN) f32
    o_ref    : (M, TN) f32      output block; doubles as the f32 accumulator
    """
    _, _, Wo, C2 = x_ref.shape
    Cin = C2 // 2
    M, _ = o_ref.shape
    Kb = wb_ref.shape[1]
    t = pl.program_id(1)
    f32 = jnp.float32

    xm = x_ref[...]
    if xm.dtype != jnp.bfloat16:
        xm = xm.astype(jnp.bfloat16)
    even = xm[:, 0].reshape(M, C2)    # input rows 2m      (ky = 1 source)
    odd = xm[:, 1].reshape(M, C2)     # input rows 2m + 1  (ky = 2 source; rolled -> ky = 0)

    def b_lhs(v):                     # LHS for the kx = 0 (previous input column) taps
        return v if Kb == C2 else v[:, Cin:]

    row = lax.broadcasted_iota(jnp.int32, (M, 1), 0)
    if img_rows == M:
        top_pad = row < Wo                      # first output row of the image tile
    else:
        top_pad = (row % img_rows) < Wo         # first output row of each folded image
    left_pad = (row % Wo) == 0                  # first output column

    # ---- kx = 1, 2 taps (input columns 2n, 2n + 1) --------------------------------
    o_ref[...] = jnp.dot(even, wa_ref[1], preferred_element_type=f32) + bias_ref[...]
    o_ref[...] += jnp.dot(odd, wa_ref[2], preferred_element_type=f32)
    # ky = 0 (input row 2m - 1): reuse the odd-row operand, roll the partial one output
    # row down on the XLU, zero the wrapped rows (top padding / image start).
    p0a = jnp.dot(odd, wa_ref[0], preferred_element_type=f32)
    o_ref[...] += jnp.where(top_pad, 0.0, pltpu.roll(p0a, shift=Wo, axis=0))

    # ---- kx = 0 tap (input column 2n - 1 -> output column n) ----------------------
    accb = jnp.dot(b_lhs(even), wb_ref[1], preferred_element_type=f32)
    accb += jnp.dot(b_lhs(odd), wb_ref[2], preferred_element_type=f32)
    p0b = jnp.dot(b_lhs(odd), wb_ref[0], preferred_element_type=f32)
    accb += jnp.where(top_pad, 0.0, pltpu.roll(p0b, shift=Wo, axis=0))
    # Shift one output column to the right; the zero fill at n == 0 is exactly the
    # left padding column.
    o_ref[...] += jnp.where(left_pad, 0.0, pltpu.roll(accb, shift=1, axis=0))

    # ---- halo: ky = 0 taps of the first output row of a non-first row tile --------
    # Only traced when an image is split across row tiles; skipped at t == 0 where the
    # top padding row is exactly zero.
    if has_halo:
        @pl.when(t > 0)
        def _():
            hal = halo_ref[0, 0]
            if hal.dtype != jnp.bfloat16:
                hal = hal.astype(jnp.bfloat16)
            patch = jnp.dot(hal, wa_ref[0], preferred_element_type=f32)
            hb = jnp.dot(b_lhs(hal), wb_ref[0], preferred_element_type=f32)
            col0 = lax.broadcasted_iota(jnp.int32, (Wo, 1), 0) == 0
            patch += jnp.where(col0, 0.0, pltpu.roll(hb, shift=1, axis=0))
            o_ref[pl.ds(0, Wo), :] += patch


def _choose_tiles(B, Ho, Wo, Cin, Cout, x_itemsize):
    """Pick (TN, NC, Kb, tm, T, G) under a conservative per-step VMEM budget."""
    C2 = 2 * Cin
    if Cout % 256 == 0:
        tn = 256
    elif Cout % 128 == 0:
        tn = 128
    else:
        tn = Cout   # TODO(synk): lane-pack (Wo, Cout) before the store for Cout < 128.
    nc = Cout // tn
    kb = Cin if Cin % 128 == 0 else C2   # zero-pad K when the odd-col lane slice would
                                         # cross a 128-lane tile boundary (e.g. Cin=320)
    w_bytes = (3 * C2 * tn + 3 * kb * tn) * 2 * 2          # bf16 wa+wb, double-buffered

    def step_bytes(row_pairs):
        xb = row_pairs * 2 * Wo * C2 * x_itemsize * 2      # x block, double-buffered
        ob = row_pairs * Wo * tn * 4 * 2                   # f32 out block, double-buffered
        return xb + ob

    budget = 20 << 20   # fits every generation's 32 MiB scoped default with headroom

    tm = 1
    for cand in range(Ho, 0, -1):                          # largest row tile that fits
        if Ho % cand == 0 and w_bytes + step_bytes(cand) <= budget:
            tm = cand
            break
    t_steps = Ho // tm

    g = 1
    if tm == Ho:                                           # fold whole images per block
        max_steps = B * t_steps * nc
        for cand in range(B, 1, -1):
            if B % cand:
                continue
            if cand * Ho * Wo > 1024:
                continue
            if w_bytes + step_bytes(cand * Ho) > budget:
                continue
            if (B // cand) * t_steps * nc < min(2, max_steps):
                continue                                   # keep >= 2 steps for 2 TCs
            g = cand
            break

    # The output row-block must be sublane aligned unless it spans the whole array.
    if (g * tm * Wo) % 8 != 0 and (B // g) * t_steps != 1:
        g, tm, t_steps = B, Ho, 1
    return tn, nc, kb, tm, t_steps, g


def downsample2d_nhwc(x, weight, bias):
    """x: (B, H, W, Cin) NHWC (f32 or bf16). weight: (Cout, Cin, 3, 3). bias: (Cout,)."""
    B, H, W, Cin = x.shape
    Cout = weight.shape[0]
    assert weight.shape == (Cout, Cin, 3, 3)
    assert bias.shape == (Cout,)
    # TODO(synk): odd H/W (PyTorch ceil-mode output) needs an extra edge-column path.
    assert H % 2 == 0 and W % 2 == 0, "stride-2 / pad-1 fast path assumes even H, W"
    Ho, Wo = H // 2, W // 2
    C2 = 2 * Cin
    x_itemsize = jnp.dtype(x.dtype).itemsize

    tn, nc, kb, tm, t_steps, g = _choose_tiles(B, Ho, Wo, Cin, Cout, x_itemsize)
    nb = B // g
    gr = g * tm              # input row-pairs per block
    m = gr * Wo              # output pixels per block

    # Free, row-major reshapes (no HBM copies): fold batch into the row axis and pack
    # the stride-2 column pair into the lane dim.
    xr = x.reshape(B * Ho, 2, Wo, C2)

    # One-time weight prep: w_t[ky, kx] = weight[:, :, ky, kx].T  (Cin, Cout).
    w_t = jnp.transpose(weight, (2, 3, 1, 0))                          # (3, 3, Cin, Cout)
    wa = jnp.concatenate([w_t[:, 1], w_t[:, 2]], axis=1).astype(jnp.bfloat16)  # (3,2Cin,Cout)
    if kb == Cin:
        wb = w_t[:, 0].astype(jnp.bfloat16)                            # (3, Cin, Cout)
    else:   # zero-pad K so the kernel never lane-slices an unaligned operand
        wb = jnp.concatenate([jnp.zeros_like(w_t[:, 0]), w_t[:, 0]],
                             axis=1).astype(jnp.bfloat16)              # (3, 2Cin, Cout)
    bias2 = bias.reshape(1, Cout).astype(jnp.float32)

    kernel = functools.partial(_downsample_kernel,
                               img_rows=tm * Wo,
                               has_halo=(t_steps > 1))

    est_vmem = ((3 * C2 * tn + 3 * kb * tn) * 2 * 2
                + gr * 2 * Wo * C2 * x_itemsize * 2
                + m * tn * 4 * 2)
    ckw = dict(dimension_semantics=("parallel", "parallel", "parallel"))
    if est_vmem > (30 << 20):     # only override once tiles outgrow the scoped default
        ckw["vmem_limit_bytes"] = int(min(est_vmem * 5 // 4, 64 << 20))

    out = pl.pallas_call(
        kernel,
        out_shape=jax.ShapeDtypeStruct((B * Ho * Wo, Cout), jnp.float32),
        grid=(nb, t_steps, nc),
        in_specs=[
            pl.BlockSpec((gr, 2, Wo, C2), lambda b, t, c: (b * t_steps + t, 0, 0, 0)),
            pl.BlockSpec((1, 1, Wo, C2),
                         lambda b, t, c: (jnp.maximum((b * t_steps + t) * tm - 1, 0),
                                          1, 0, 0)),
            pl.BlockSpec((3, C2, tn), lambda b, t, c: (0, 0, c)),
            pl.BlockSpec((3, kb, tn), lambda b, t, c: (0, 0, c)),
            pl.BlockSpec((1, tn), lambda b, t, c: (0, c)),
        ],
        out_specs=pl.BlockSpec((m, tn), lambda b, t, c: (b * t_steps + t, c)),
        compiler_params=pltpu.CompilerParams(**ckw),
    )(xr, xr, wa, wb, bias2)

    return out.reshape(B, Ho, Wo, Cout)


def downsample2d(x_nchw, weight, bias):
    """PyTorch-interface adapter: x (B, Cin, H, W) -> (B, Cout, H//2, W//2)."""
    x = jnp.transpose(x_nchw, (0, 2, 3, 1))
    y = downsample2d_nhwc(x, weight, bias)
    return jnp.transpose(y, (0, 3, 1, 2))


if __name__ == "__main__":
    B, C, H, W = 2, 128, 16, 16     # real SD down blocks use C in {320, 640, 1280}
    key = jax.random.PRNGKey(0)
    k1, k2, k3 = jax.random.split(key, 3)
    x = jax.random.normal(k1, (B, C, H, W), dtype=jnp.float32)
    w_scale = 1.0 / (3.0 * (C ** 0.5))
    weight = jax.random.normal(k2, (C, C, 3, 3), dtype=jnp.float32) * w_scale
    bias = jax.random.normal(k3, (C,), dtype=jnp.float32) * 0.02

    out = downsample2d(x, weight, bias)
    out = jax.block_until_ready(out)
    assert out.shape == (B, C, H // 2, W // 2)

    # Reference: identical math on the same bf16-rounded inputs, f32 accumulation.
    ref = lax.conv_general_dilated(
        x.astype(jnp.bfloat16).astype(jnp.float32),
        weight.astype(jnp.bfloat16).astype(jnp.float32),
        window_strides=(2, 2),
        padding=((1, 1), (1, 1)),
        dimension_numbers=("NCHW", "OIHW", "NCHW"),
        precision=lax.Precision.HIGHEST,
    ) + bias[None, :, None, None]
    ref = jax.block_until_ready(ref)

    err = float(jnp.max(jnp.abs(out - ref)))
    scale = float(jnp.max(jnp.abs(ref)))
    assert err <= 5e-3 * max(1.0, scale), f"max abs err {err} (ref scale {scale})"
    print("KERNEL_OK")
</pallas_src>

<mosaic_0001>
module attributes {stable_mosaic.version = 11 : i64} {
  func.func @_downsample_kernel(%arg0: i32, %arg1: i32, %arg2: i32, %arg3: memref<8x2x8x256xf32, #tpu.memory_space<vmem>>, %arg4: memref<1x1x8x256xf32, #tpu.memory_space<vmem>>, %arg5: memref<3x256x128xbf16, #tpu.memory_space<vmem>>, %arg6: memref<3x128x128xbf16, #tpu.memory_space<vmem>>, %arg7: memref<1x128xf32, #tpu.memory_space<vmem>>, %arg8: memref<64x128xf32, #tpu.memory_space<vmem>>) attributes {dimension_semantics = [#tpu.dimension_semantics<parallel>, #tpu.dimension_semantics<parallel>, #tpu.dimension_semantics<parallel>], iteration_bounds = array<i64: 2, 1, 1>, scalar_prefetch = 0 : i64, scratch_operands = 0 : i64, tpu.core_type = #tpu.core_type<tc>, window_params = [{transform_indices = @transform_0, window_bounds = array<i64: 8, 2, 8, 256>}, {transform_indices = @transform_1, window_bounds = array<i64: 1, 1, 8, 256>}, {transform_indices = @transform_2, window_bounds = array<i64: 3, 256, 128>}, {transform_indices = @transform_3, window_bounds = array<i64: 3, 128, 128>}, {transform_indices = @transform_4, window_bounds = array<i64: 1, 128>}, {transform_indices = @transform_5, window_bounds = array<i64: 64, 128>}]} {
    %c0 = arith.constant 0 : index
    %c0_0 = arith.constant 0 : index
    %c0_1 = arith.constant 0 : index
    %c0_2 = arith.constant 0 : index
    %0 = vector.load %arg3[%c0, %c0_0, %c0_1, %c0_2] : memref<8x2x8x256xf32, #tpu.memory_space<vmem>>, vector<8x2x8x256xf32>
    %1 = arith.truncf %0 : vector<8x2x8x256xf32> to vector<8x2x8x256xbf16>
    %2 = vector.extract_strided_slice %1 {offsets = [0, 0, 0, 0], sizes = [8, 1, 8, 256], strides = [1, 1, 1, 1]} : vector<8x2x8x256xbf16> to vector<8x1x8x256xbf16>
    %3 = vector.shape_cast %2 : vector<8x1x8x256xbf16> to vector<8x8x256xbf16>
    %4 = vector.shape_cast %3 : vector<8x8x256xbf16> to vector<64x256xbf16>
    %5 = vector.extract_strided_slice %1 {offsets = [0, 1, 0, 0], sizes = [8, 1, 8, 256], strides = [1, 1, 1, 1]} : vector<8x2x8x256xbf16> to vector<8x1x8x256xbf16>
    %6 = vector.shape_cast %5 : vector<8x1x8x256xbf16> to vector<8x8x256xbf16>
    %7 = vector.shape_cast %6 : vector<8x8x256xbf16> to vector<64x256xbf16>
    %8 = tpu.iota {dimensions = array<i32: 0>} : vector<64x1xi32>
    %c8_i32 = arith.constant 8 : i32
    %9 = vector.broadcast %c8_i32 : i32 to vector<64x1xi32>
    %10 = arith.cmpi slt, %8, %9 : vector<64x1xi32>
    %c8_i32_3 = arith.constant 8 : i32
    %c0_i32 = arith.constant 0 : i32
    %11 = arith.cmpi eq, %c8_i32_3, %c0_i32 : i32
    %c1_i32 = arith.constant 1 : i32
    %12 = arith.select %11, %c1_i32, %c8_i32_3 : i32
    %13 = vector.broadcast %12 : i32 to vector<64x1xi32>
    %14 = arith.remsi %8, %13 : vector<64x1xi32>
    %c0_i32_4 = arith.constant 0 : i32
    %15 = vector.broadcast %c0_i32_4 : i32 to vector<64x1xi32>
    %16 = arith.cmpi ne, %14, %15 : vector<64x1xi32>
    %c0_i32_5 = arith.constant 0 : i32
    %17 = vector.broadcast %c0_i32_5 : i32 to vector<64x1xi32>
    %18 = arith.cmpi slt, %14, %17 : vector<64x1xi32>
    %c0_i32_6 = arith.constant 0 : i32
    %19 = arith.cmpi slt, %12, %c0_i32_6 : i32
    %20 = vector.broadcast %19 : i1 to vector<64x1xi1>
    %21 = vector.broadcast %20 : vector<64x1xi1> to vector<64x1xi1>
    %22 = arith.xori %18, %21 : vector<64x1xi1>
    %23 = arith.andi %22, %16 : vector<64x1xi1>
    %24 = vector.broadcast %12 : i32 to vector<64x1xi32>
    %25 = arith.addi %14, %24 : vector<64x1xi32>
    %26 = arith.select %23, %25, %14 : vector<64x1xi1>, vector<64x1xi32>
    %c0_i32_7 = arith.constant 0 : i32
    %27 = vector.broadcast %c0_i32_7 : i32 to vector<64x1xi32>
    %28 = arith.cmpi eq, %26, %27 : vector<64x1xi32>
    %c1 = arith.constant 1 : index
    %c0_8 = arith.constant 0 : index
    %c0_9 = arith.constant 0 : index
    %29 = vector.load %arg5[%c1, %c0_8, %c0_9] : memref<3x256x128xbf16, #tpu.memory_space<vmem>>, vector<1x256x128xbf16>
    %30 = vector.shape_cast %29 : vector<1x256x128xbf16> to vector<256x128xbf16>
    %cst = arith.constant dense<0.000000e+00> : vector<64x128xf32>
    %31 = tpu.matmul %4, %30, %cst {dimension_numbers = #tpu.dot_dimension_numbers<[1], [0], [0], [1], [0, 0, 1, 1], [], []>} : vector<64x256xbf16>, vector<256x128xbf16>, vector<64x128xf32> -> vector<64x128xf32>
    %c0_10 = arith.constant 0 : index
    %c0_11 = arith.constant 0 : index
    %32 = vector.load %arg7[%c0_10, %c0_11] : memref<1x128xf32, #tpu.memory_space<vmem>>, vector<1x128xf32>
    %33 = vector.broadcast %32 : vector<1x128xf32> to vector<64x128xf32>
    %34 = arith.addf %31, %33 : vector<64x128xf32>
    %c0_12 = arith.constant 0 : index
    %c0_13 = arith.constant 0 : index
    %35 = vector.load %arg8[%c0_12, %c0_13] : memref<64x128xf32, #tpu.memory_space<vmem>>, vector<64x128xf32>
    tpu.vector_store %arg8[%c0_12, %c0_13], %34 {strides = array<i32>} : memref<64x128xf32, #tpu.memory_space<vmem>>, vector<64x128xf32>,
    %c0_14 = arith.constant 0 : index
    %c0_15 = arith.constant 0 : index
    %36 = vector.load %arg8[%c0_14, %c0_15] : memref<64x128xf32, #tpu.memory_space<vmem>>, vector<64x128xf32>
    %c2 = arith.constant 2 : index
    %c0_16 = arith.constant 0 : index
    %c0_17 = arith.constant 0 : index
    %37 = vector.load %arg5[%c2, %c0_16, %c0_17] : memref<3x256x128xbf16, #tpu.memory_space<vmem>>, vector<1x256x128xbf16>
    %38 = vector.shape_cast %37 : vector<1x256x128xbf16> to vector<256x128xbf16>
    %cst_18 = arith.constant dense<0.000000e+00> : vector<64x128xf32>
    %39 = tpu.matmul %7, %38, %cst_18 {dimension_numbers = #tpu.dot_dimension_numbers<[1], [0], [0], [1], [0, 0, 1, 1], [], []>} : vector<64x256xbf16>, vector<256x128xbf16>, vector<64x128xf32> -> vector<64x128xf32>
    %40 = arith.addf %36, %39 : vector<64x128xf32>
    %c0_19 = arith.constant 0 : index
    %c0_20 = arith.constant 0 : index
    %41 = vector.load %arg8[%c0_19, %c0_20] : memref<64x128xf32, #tpu.memory_space<vmem>>, vector<64x128xf32>
    tpu.vector_store %arg8[%c0_19, %c0_20], %40 {strides = array<i32>} : memref<64x128xf32, #tpu.memory_space<vmem>>, vector<64x128xf32>,
    %c0_21 = arith.constant 0 : index
    %c0_22 = arith.constant 0 : index
    %c0_23 = arith.constant 0 : index
    %42 = vector.load %arg5[%c0_21, %c0_22, %c0_23] : memref<3x256x128xbf16, #tpu.memory_space<vmem>>, vector<1x256x128xbf16>
    %43 = vector.shape_cast %42 : vector<1x256x128xbf16> to vector<256x128xbf16>
    %cst_24 = arith.constant dense<0.000000e+00> : vector<64x128xf32>
    %44 = tpu.matmul %7, %43, %cst_24 {dimension_numbers = #tpu.dot_dimension_numbers<[1], [0], [0], [1], [0, 0, 1, 1], [], []>} : vector<64x256xbf16>, vector<256x128xbf16>, vector<64x128xf32> -> vector<64x128xf32>
    %c0_25 = arith.constant 0 : index
    %c0_26 = arith.constant 0 : index
    %45 = vector.load %arg8[%c0_25, %c0_26] : memref<64x128xf32, #tpu.memory_space<vmem>>, vector<64x128xf32>
    %c8_i32_27 = arith.constant 8 : i32
    %46 = tpu.dynamic_rotate %44 by %c8_i32_27 dim 0 : vector<64x128xf32>, i32 -> vector<64x128xf32>
    %cst_28 = arith.constant 0.000000e+00 : f32
    %47 = vector.shape_cast %10 : vector<64x1xi1> to vector<64x1xi1>
    %48 = vector.broadcast %47 : vector<64x1xi1> to vector<64x128xi1>
    %49 = vector.broadcast %cst_28 : f32 to vector<64x128xf32>
    %50 = arith.select %48, %49, %46 : vector<64x128xi1>, vector<64x128xf32>
    %51 = arith.addf %45, %50 : vector<64x128xf32>
    %c0_29 = arith.constant 0 : index
    %c0_30 = arith.constant 0 : index
    %52 = vector.load %arg8[%c0_29, %c0_30] : memref<64x128xf32, #tpu.memory_space<vmem>>, vector<64x128xf32>
    tpu.vector_store %arg8[%c0_29, %c0_30], %51 {strides = array<i32>} : memref<64x128xf32, #tpu.memory_space<vmem>>, vector<64x128xf32>,
    %53 = vector.extract_strided_slice %4 {offsets = [0, 128], sizes = [64, 128], strides = [1, 1]} : vector<64x256xbf16> to vector<64x128xbf16>
    %c1_31 = arith.constant 1 : index
    %c0_32 = arith.constant 0 : index
    %c0_33 = arith.constant 0 : index
    %54 = vector.load %arg6[%c1_31, %c0_32, %c0_33] : memref<3x128x128xbf16, #tpu.memory_space<vmem>>, vector<1x128x128xbf16>
    %55 = vector.shape_cast %54 : vector<1x128x128xbf16> to vector<128x128xbf16>
    %cst_34 = arith.constant dense<0.000000e+00> : vector<64x128xf32>
    %56 = tpu.matmul %53, %55, %cst_34 {dimension_numbers = #tpu.dot_dimension_numbers<[1], [0], [0], [1], [0, 0, 1, 1], [], []>} : vector<64x128xbf16>, vector<128x128xbf16>, vector<64x128xf32> -> vector<64x128xf32>
    %57 = vector.extract_strided_slice %7 {offsets = [0, 128], sizes = [64, 128], strides = [1, 1]} : vector<64x256xbf16> to vector<64x128xbf16>
    %c2_35 = arith.constant 2 : index
    %c0_36 = arith.constant 0 : index
    %c0_37 = arith.constant 0 : index
    %58 = vector.load %arg6[%c2_35, %c0_36, %c0_37] : memref<3x128x128xbf16, #tpu.memory_space<vmem>>, vector<1x128x128xbf16>
    %59 = vector.shape_cast %58 : vector<1x128x128xbf16> to vector<128x128xbf16>
    %cst_38 = arith.constant dense<0.000000e+00> : vector<64x128xf32>
    %60 = tpu.matmul %57, %59, %cst_38 {dimension_numbers = #tpu.dot_dimension_numbers<[1], [0], [0], [1], [0, 0, 1, 1], [], []>} : vector<64x128xbf16>, vector<128x128xbf16>, vector<64x128xf32> -> vector<64x128xf32>
    %61 = arith.addf %56, %60 : vector<64x128xf32>
    %62 = vector.extract_strided_slice %7 {offsets = [0, 128], sizes = [64, 128], strides = [1, 1]} : vector<64x256xbf16> to vector<64x128xbf16>
    %c0_39 = arith.constant 0 : index
    %c0_40 = arith.constant 0 : index
    %c0_41 = arith.constant 0 : index
    %63 = vector.load %arg6[%c0_39, %c0_40, %c0_41] : memref<3x128x128xbf16, #tpu.memory_space<vmem>>, vector<1x128x128xbf16>
    %64 = vector.shape_cast %63 : vector<1x128x128xbf16> to vector<128x128xbf16>
    %cst_42 = arith.constant dense<0.000000e+00> : vector<64x128xf32>
    %65 = tpu.matmul %62, %64, %cst_42 {dimension_numbers = #tpu.dot_dimension_numbers<[1], [0], [0], [1], [0, 0, 1, 1], [], []>} : vector<64x128xbf16>, vector<128x128xbf16>, vector<64x128xf32> -> vector<64x128xf32>
    %c8_i32_43 = arith.constant 8 : i32
    %66 = tpu.dynamic_rotate %65 by %c8_i32_43 dim 0 : vector<64x128xf32>, i32 -> vector<64x128xf32>
    %cst_44 = arith.constant 0.000000e+00 : f32
    %67 = vector.shape_cast %10 : vector<64x1xi1> to vector<64x1xi1>
    %68 = vector.broadcast %67 : vector<64x1xi1> to vector<64x128xi1>
    %69 = vector.broadcast %cst_44 : f32 to vector<64x128xf32>
    %70 = arith.select %68, %69, %66 : vector<64x128xi1>, vector<64x128xf32>
    %71 = arith.addf %61, %70 : vector<64x128xf32>
    %c0_45 = arith.constant 0 : index
    %c0_46 = arith.constant 0 : index
    %72 = vector.load %arg8[%c0_45, %c0_46] : memref<64x128xf32, #tpu.memory_space<vmem>>, vector<64x128xf32>
    %c1_i32_47 = arith.constant 1 : i32
    %73 = tpu.dynamic_rotate %71 by %c1_i32_47 dim 0 : vector<64x128xf32>, i32 -> vector<64x128xf32>
    %cst_48 = arith.constant 0.000000e+00 : f32
    %74 = vector.shape_cast %28 : vector<64x1xi1> to vector<64x1xi1>
    %75 = vector.broadcast %74 : vector<64x1xi1> to vector<64x128xi1>
    %76 = vector.broadcast %cst_48 : f32 to vector<64x128xf32>
    %77 = arith.select %75, %76, %73 : vector<64x128xi1>, vector<64x128xf32>
    %78 = arith.addf %72, %77 : vector<64x128xf32>
    %c0_49 = arith.constant 0 : index
    %c0_50 = arith.constant 0 : index
    %79 = vector.load %arg8[%c0_49, %c0_50] : memref<64x128xf32, #tpu.memory_space<vmem>>, vector<64x128xf32>
    tpu.vector_store %arg8[%c0_49, %c0_50], %78 {strides = array<i32>} : memref<64x128xf32, #tpu.memory_space<vmem>>, vector<64x128xf32>,
    return
  }
  func.func @transform_0(%arg0: i32, %arg1: i32, %arg2: i32) -> (i32, i32, i32, i32) {
    %c1_i32 = arith.constant 1 : i32
    %0 = arith.muli %arg0, %c1_i32 : i32
    %1 = arith.addi %0, %arg1 : i32
    %c0_i32 = arith.constant 0 : i32
    %c0_i32_0 = arith.constant 0 : i32
    %c0_i32_1 = arith.constant 0 : i32
    %c0_i32_2 = arith.constant 0 : i32
    return %1, %c0_i32, %c0_i32_0, %c0_i32_1 : i32, i32, i32, i32
  }
  func.func @transform_1(%arg0: i32, %arg1: i32, %arg2: i32) -> (i32, i32, i32, i32) {
    %c1_i32 = arith.constant 1 : i32
    %0 = arith.muli %arg0, %c1_i32 : i32
    %1 = arith.addi %0, %arg1 : i32
    %c8_i32 = arith.constant 8 : i32
    %2 = arith.muli %1, %c8_i32 : i32
    %c1_i32_0 = arith.constant 1 : i32
    %3 = arith.subi %2, %c1_i32_0 : i32
    %c0_i32 = arith.constant 0 : i32
    %4 = arith.maxsi %3, %c0_i32 : i32
    %c1_i32_1 = arith.constant 1 : i32
    %c0_i32_2 = arith.constant 0 : i32
    %c0_i32_3 = arith.constant 0 : i32
    %c0_i32_4 = arith.constant 0 : i32
    return %4, %c1_i32_1, %c0_i32_2, %c0_i32_3 : i32, i32, i32, i32
  }
  func.func @transform_2(%arg0: i32, %arg1: i32, %arg2: i32) -> (i32, i32, i32) {
    %c0_i32 = arith.constant 0 : i32
    %c0_i32_0 = arith.constant 0 : i32
    %c0_i32_1 = arith.constant 0 : i32
    return %c0_i32, %c0_i32_0, %arg2 : i32, i32, i32
  }
  func.func @transform_3(%arg0: i32, %arg1: i32, %arg2: i32) -> (i32, i32, i32) {
    %c0_i32 = arith.constant 0 : i32
    %c0_i32_0 = arith.constant 0 : i32
    %c0_i32_1 = arith.constant 0 : i32
    return %c0_i32, %c0_i32_0, %arg2 : i32, i32, i32
  }
  func.func @transform_4(%arg0: i32, %arg1: i32, %arg2: i32) -> (i32, i32) {
    %c0_i32 = arith.constant 0 : i32
    %c0_i32_0 = arith.constant 0 : i32
    return %c0_i32, %arg2 : i32, i32
  }
  func.func @transform_5(%arg0: i32, %arg1: i32, %arg2: i32) -> (i32, i32) {
    %c1_i32 = arith.constant 1 : i32
    %0 = arith.muli %arg0, %c1_i32 : i32
    %1 = arith.addi %0, %arg1 : i32
    %c0_i32 = arith.constant 0 : i32
    return %1, %arg2 : i32, i32
  }
}

</mosaic_0001>

<llo_original>
// kernel: tpu_custom_call.1
$region0: #{tpu_custom_call.1}
  #allocation0 [shape = 'u32[]', space=smem, size = 0x4, offset = 0x4, fixed_abs, tag = 'smem constant byte address 0x4 - core index']
  #allocation1 [shape = 'u32[144,128]{1,0:T(1,128)}', space=vmem, size = 0x12000, scoped, tag = 'internal scratch']
  %s0 = inlined_call_operand.hbm [shape: f32[16,2,8,256], index: 0, kind: input, shape index: {}]
  %s1 = inlined_call_operand.hbm [shape: f32[16,2,8,256], index: 1, kind: input, shape index: {}]
  %s2 = inlined_call_operand.hbm [shape: bf16[3,256,128], index: 2, kind: input, shape index: {}]
  %s3 = inlined_call_operand.hbm [shape: bf16[3,128,128], index: 3, kind: input, shape index: {}]
  %s4 = inlined_call_operand.vmem [shape: f32[1,128], index: 4, kind: input, shape index: {}]
  %s5 = inlined_call_operand.hbm [shape: f32[128,128], index: 5, kind: output, shape index: {}]
  %s6 = sld [smem:[#allocation0]]
  $region69: #{tpu_custom_call.1} parent=0
    _
  %s8 = ssub.s32 1, %s6
  %s9 = scalar_select 0, %s8, %s6
  $region1: #{tpu_custom_call.1} parent=0
    #allocation2 [shape = 'u8[262144]{0}', space=vmem, size = 0x40000, scoped, tag = 'input window, operand 0']
    #allocation3 [shape = 's32[2]{0}', space=sflag, size = 0x8, scoped, tag = 'scoped memory for tpu_custom_call.1']
    #allocation4 [shape = 's32[2]{0}', space=sflag, size = 0x8, scoped, tag = 'scoped memory for tpu_custom_call.1']
    #allocation5 [shape = 'u8[16384]{0}', space=vmem, size = 0x4000, scoped, tag = 'input window, operand 1']
    #allocation6 [shape = 's32[2]{0}', space=sflag, size = 0x8, scoped, tag = 'scoped memory for tpu_custom_call.1']
    #allocation7 [shape = 'u8[196608]{0}', space=vmem, size = 0x30000, scoped, tag = 'input window, operand 2, single buffered']
    #allocation8 [shape = 'u8[98304]{0}', space=vmem, size = 0x18000, scoped, tag = 'input window, operand 3, single buffered']
    #allocation9 [shape = 's32[1]{0}', space=sflag, size = 0x4, scoped, tag = 'scoped memory for tpu_custom_call.1']
    #allocation10 [shape = 'u8[65536]{0}', space=vmem, size = 0x10000, scoped, tag = 'output window, operand 0']
    %10 = vsyncpa [#allocation3], 0
    %s11 = scalar_lea.sflag [#allocation3], 1
    %12 = vsyncpa %s11, 0
    %13 = vsyncpa [#allocation6], 0
    %s14 = scalar_lea.sflag [#allocation6], 1
    %15 = vsyncpa %s14, 0
    %16 = vsyncpa [#allocation9], 0
    %17 = vsyncpa [#allocation4], 0
    %s18 = scalar_lea.sflag [#allocation4], 1
    %19 = vsyncpa %s18, 0
    loop: start=0, step=1, limit=4
    $region2: #{tpu_custom_call.1} parent=1 // loop_pre_header
      _
    $region3: #{tpu_custom_call.1} parent=1 // loop_header
      %s21 = sphi 0, %s25
      %p22 = scmp.ge.s32.totalorder %s21, 4
      %s28 = sphi 0, %s47
      %s29 = sphi 0, %s43
      %s30 = sphi 0, %s39
      %s31 = sphi 0, %s28
      %s32 = sphi 0, %s29
      %s33 = sphi 0, %s30
      %s34 = sphi 0, %s31
      %s35 = sphi 0, %s32
      %s36 = sphi 0, %s33
      %s52 = sphi 0, %s54
      %s55 = sphi 0, %s52
      %s56 = sphi 0, %s55
      %s72 = sphi 0, %s56
      %s88 = sphi 0, %s90
      %s91 = sphi 0, %s88
      %s92 = sphi 0, %s91
      %s108 = sphi 0, %s92
      %s114 = sphi 0, %s116
      %s117 = sphi 0, %s114
      %s118 = sphi 0, %s117
      %s134 = sphi 0, %s118
      %s140 = sphi 0, %s142
      %s143 = sphi 0, %s140
      %s144 = sphi 0, %s143
      %s160 = sphi 0, %s144
      %s166 = sphi 0, %s168
      %s169 = sphi 0, %s166
      %s170 = sphi 0, %s169
      %s186 = sphi 0, %s170
      %s196 = sphi 0, %s198
      %s199 = sphi 0, %s196
      %s200 = sphi 0, %s199
      %s216 = sphi 0, %s200
    $region4: #{tpu_custom_call.1} parent=1 // loop_header_branch
      %24 = sbr.rel (%p22) target = $region8
    $region5: #{tpu_custom_call.1} parent=1 // loop_body
      %s26 = ssub.s32 %s21, 1
      %s27 = ssub.s32 %s21, 2
      %s37 = sadd.s32 1, %s30
      %p38 = scmp.ge.s32.totalorder %s37, 1
      %s39 = scalar_select %p38, 0, %s37
      %s40 = sadd.s32 1, %s29
      %s41 = scalar_select %p38, %s40, %s29
      %p42 = scmp.ge.s32.totalorder %s41, 1
      %s43 = scalar_select %p42, 0, %s41
      %s44 = sadd.s32 1, %s28
      %s45 = scalar_select %p42, %s44, %s28
      %p46 = scmp.ge.s32.totalorder %s45, 2
      %s47 = scalar_select %p46, 0, %s45
      %s48 = sadd.s32 %s28, %s29
      %s49 = sadd.s32 %s47, %s43
      %s50 = ssub.s32 %s48, %s49
      %p51 = scmp.eq.s32.totalorder %s50, 0
      %s53 = sadd.s32 %s52, 1
      %s54 = scalar_select %p51, %s52, %s53
      %p57 = pneg %p51
      %p58 = scmp.eq.s32.totalorder %s21, 1
      %p59 = por %p57, %p58
      %p60 = scmp.ne.s32.totalorder %s52, %s55
      %p61 = scmp.eq.s32.totalorder %s21, 0
      %p62 = por %p60, %p61
      %p63 = scmp.ne.s32.totalorder %s52, %s55
      %p64 = scmp.eq.s32.totalorder %s26, 1
      %p65 = por %p63, %p64
      %p66 = scmp.ne.s32.totalorder %s55, %s56
      %p67 = scmp.eq.s32.totalorder %s26, 0
      %p68 = por %p66, %p67
      %p69 = scmp.ne.s32.totalorder %s55, %s56
      %p70 = scmp.eq.s32.totalorder %s27, 1
      %p71 = por %p69, %p70
      %p73 = scmp.ne.s32.totalorder %s56, %s72
      %p74 = scmp.eq.s32.totalorder %s27, 0
      %p75 = por %p73, %p74
      %s76 = sadd.s32 %s28, %s29
      %s77 = smul.u32 %s76, 8
      %s78 = ssub.s32 %s77, 1
      %p79 = scmp.gt.s32.totalorder %s78, 0
      %s80 = scalar_select %p79, %s78, 0
      %s81 = sadd.s32 %s47, %s43
      %s82 = smul.u32 %s81, 8
      %s83 = ssub.s32 %s82, 1
      %p84 = scmp.gt.s32.totalorder %s83, 0
      %s85 = scalar_select %p84, %s83, 0
      %s86 = ssub.s32 %s80, %s85
      %p87 = scmp.eq.s32.totalorder %s86, 0
      %s89 = sadd.s32 %s88, 1
      %s90 = scalar_select %p87, %s88, %s89
      %p93 = pneg %p87
      %p94 = scmp.eq.s32.totalorder %s21, 1
      %p95 = por %p93, %p94
      %p96 = scmp.ne.s32.totalorder %s88, %s91
      %p97 = scmp.eq.s32.totalorder %s21, 0
      %p98 = por %p96, %p97
      %p99 = scmp.ne.s32.totalorder %s88, %s91
      %p100 = scmp.eq.s32.totalorder %s26, 1
      %p101 = por %p99, %p100
      %p102 = scmp.ne.s32.totalorder %s91, %s92
      %p103 = scmp.eq.s32.totalorder %s26, 0
      %p104 = por %p102, %p103
      %p105 = scmp.ne.s32.totalorder %s91, %s92
      %p106 = scmp.eq.s32.totalorder %s27, 1
      %p107 = por %p105, %p106
      %p109 = scmp.ne.s32.totalorder %s92, %s108
      %p110 = scmp.eq.s32.totalorder %s27, 0
      %p111 = por %p109, %p110
      %s112 = ssub.s32 %s30, %s39
      %p113 = scmp.eq.s32.totalorder %s112, 0
      %s115 = sadd.s32 %s114, 1
      %s116 = scalar_select %p113, %s114, %s115
      %p119 = pneg %p113
      %p120 = scmp.eq.s32.totalorder %s21, 1
      %p121 = por %p119, %p120
      %p122 = scmp.ne.s32.totalorder %s114, %s117
      %p123 = scmp.eq.s32.totalorder %s21, 0
      %p124 = por %p122, %p123
      %p125 = scmp.ne.s32.totalorder %s114, %s117
      %p126 = scmp.eq.s32.totalorder %s26, 1
      %p127 = por %p125, %p126
      %p128 = scmp.ne.s32.totalorder %s117, %s118
      %p129 = scmp.eq.s32.totalorder %s26, 0
      %p130 = por %p128, %p129
      %p131 = scmp.ne.s32.totalorder %s117, %s118
      %p132 = scmp.eq.s32.totalorder %s27, 1
      %p133 = por %p131, %p132
      %p135 = scmp.ne.s32.totalorder %s118, %s134
      %p136 = scmp.eq.s32.totalorder %s27, 0
      %p137 = por %p135, %p136
      %s138 = ssub.s32 %s30, %s39
      %p139 = scmp.eq.s32.totalorder %s138, 0
      %s141 = sadd.s32 %s140, 1
      %s142 = scalar_select %p139, %s140, %s141
      %p145 = pneg %p139
      %p146 = scmp.eq.s32.totalorder %s21, 1
      %p147 = por %p145, %p146
      %p148 = scmp.ne.s32.totalorder %s140, %s143
      %p149 = scmp.eq.s32.totalorder %s21, 0
      %p150 = por %p148, %p149
      %p151 = scmp.ne.s32.totalorder %s140, %s143
      %p152 = scmp.eq.s32.totalorder %s26, 1
      %p153 = por %p151, %p152
      %p154 = scmp.ne.s32.totalorder %s143, %s144
      %p155 = scmp.eq.s32.totalorder %s26, 0
      %p156 = por %p154, %p155
      %p157 = scmp.ne.s32.totalorder %s143, %s144
      %p158 = scmp.eq.s32.totalorder %s27, 1
      %p159 = por %p157, %p158
      %p161 = scmp.ne.s32.totalorder %s144, %s160
      %p162 = scmp.eq.s32.totalorder %s27, 0
      %p163 = por %p161, %p162
      %s164 = ssub.s32 %s30, %s39
      %p165 = scmp.eq.s32.totalorder %s164, 0
      %s167 = sadd.s32 %s166, 1
      %s168 = scalar_select %p165, %s166, %s167
      %p171 = pneg %p165
      %p172 = scmp.eq.s32.totalorder %s21, 1
      %p173 = por %p171, %p172
      %p174 = scmp.ne.s32.totalorder %s166, %s169
      %p175 = scmp.eq.s32.totalorder %s21, 0
      %p176 = por %p174, %p175
      %p177 = scmp.ne.s32.totalorder %s166, %s169
      %p178 = scmp.eq.s32.totalorder %s26, 1
      %p179 = por %p177, %p178
      %p180 = scmp.ne.s32.totalorder %s169, %s170
      %p181 = scmp.eq.s32.totalorder %s26, 0
      %p182 = por %p180, %p181
      %p183 = scmp.ne.s32.totalorder %s169, %s170
      %p184 = scmp.eq.s32.totalorder %s27, 1
      %p185 = por %p183, %p184
      %p187 = scmp.ne.s32.totalorder %s170, %s186
      %p188 = scmp.eq.s32.totalorder %s27, 0
      %p189 = por %p187, %p188
      %s190 = sadd.s32 %s28, %s29
      %s191 = sadd.s32 %s47, %s43
      %s192 = ssub.s32 %s190, %s191
      %s193 = ssub.s32 %s30, %s39
      %s194 = sor.u32 %s192, %s193
      %p195 = scmp.eq.s32.totalorder %s194, 0
      %s197 = sadd.s32 %s196, 1
      %s198 = scalar_select %p195, %s196, %s197
      %p201 = pneg %p195
      %p202 = scmp.eq.s32.totalorder %s21, 1
      %p203 = por %p201, %p202
      %p204 = scmp.ne.s32.totalorder %s196, %s199
      %p205 = scmp.eq.s32.totalorder %s21, 0
      %p206 = por %p204, %p205
      %p207 = scmp.ne.s32.totalorder %s196, %s199
      %p208 = scmp.eq.s32.totalorder %s26, 1
      %p209 = por %p207, %p208
      %p210 = scmp.ne.s32.totalorder %s199, %s200
      %p211 = scmp.eq.s32.totalorder %s26, 0
      %p212 = por %p210, %p211
      %p213 = scmp.ne.s32.totalorder %s199, %s200
      %p214 = scmp.eq.s32.totalorder %s27, 1
      %p215 = por %p213, %p214
      %p217 = scmp.ne.s32.totalorder %s200, %s216
      %p218 = scmp.eq.s32.totalorder %s27, 0
      %p219 = por %p217, %p218
      %p220 = scmp.le.s32.totalorder 1, %s21
      %p221 = scmp.lt.s32.totalorder %s21, 3
      %p222 = pnand %p220, %p221
      %p223 = pneg %p222
      // Predicated region
      $region9: #{tpu_custom_call.1} parent=5 // pred_check
        _
      $region10: #{tpu_custom_call.1} parent=5 // pred_check_branch
        %225 = sbr.rel (%p222) target = $region12
      $region11: #{tpu_custom_call.1} parent=5 // pred_region
        %s226 = ssub.s32 %s21, 1
        // Predicated region
        $region13: #{tpu_custom_call.1} parent=11 // pred_check
          %p227 = pneg %p130
        $region14: #{tpu_custom_call.1} parent=11 // pred_check_branch
          %229 = sbr.rel (%p227) target = $region16
        $region15: #{tpu_custom_call.1} parent=11 // pred_region
          %s231 = ssub.s32 6144, 6144
          %232 = vsyncadd [#allocation6], %s231
          %s233 = smul.addr %s33, 64
          %s234 = scalar_lea.hbm %s2, %s233
          %s235 = sshll.u32 [#allocation7], 4
          %s236 = int_to_ptr.vmem [resolvable:$true] %s235
          %241 = dma.hbm_to_vmem [thread:$0]  %s234, 6144, %s236, [#allocation6], 64, 64, 4
        $region16: #{tpu_custom_call.1} parent=11 // pred_fallthru
          _
        // Predicated region
        $region17: #{tpu_custom_call.1} parent=11 // pred_check
          %p242 = pneg %p156
        $region18: #{tpu_custom_call.1} parent=11 // pred_check_branch
          %244 = sbr.rel (%p242) target = $region20
        $region19: #{tpu_custom_call.1} parent=11 // pred_region
          %s246 = ssub.s32 3072, 3072
          %247 = vsyncadd [#allocation9], %s246
          %s248 = smul.addr %s33, 64
          %s249 = scalar_lea.hbm %s3, %s248
          %s250 = sshll.u32 [#allocation8], 4
          %s251 = int_to_ptr.vmem [resolvable:$true] %s250
          %256 = dma.hbm_to_vmem [thread:$0]  %s249, 3072, %s251, [#allocation9], 64, 64, 4
        $region20: #{tpu_custom_call.1} parent=11 // pred_fallthru
          _
        // Predicated region
        $region21: #{tpu_custom_call.1} parent=11 // pred_check
          %p257 = pneg %p182
        $region22: #{tpu_custom_call.1} parent=11 // pred_check_branch
          %259 = sbr.rel (%p257) target = $region24
        $region23: #{tpu_custom_call.1} parent=11 // pred_region
          %p260 = scmp.lt.s32.totalorder %s33, 0
          %s261 = scalar_select %p260, %s33, 0
          %s262 = scalar_lea.vmem %s4, %s261
        $region24: #{tpu_custom_call.1} parent=11 // pred_fallthru
          _
      $region12: #{tpu_custom_call.1} parent=5 // pred_fallthru
        _
      %p263 = scmp.lt.s32.totalorder %s21, 2
      // Predicated region
      $region25: #{tpu_custom_call.1} parent=5 // pred_check
        %p264 = pneg %p263
      $region26: #{tpu_custom_call.1} parent=5 // pred_check_branch
        %266 = sbr.rel (%p264) target = $region28
      $region27: #{tpu_custom_call.1} parent=5 // pred_region
        // Predicated region
        $region29: #{tpu_custom_call.1} parent=27 // pred_check
          %p267 = pneg %p62
        $region30: #{tpu_custom_call.1} parent=27 // pred_check_branch
          %269 = sbr.rel (%p267) target = $region32
        $region31: #{tpu_custom_call.1} parent=27 // pred_region
          %s270 = sand.u32 %s52, 1
          %s271 = scalar_lea.sflag [#allocation3], %s270
          %s272 = sand.u32 %s52, 1
          %s273 = smul.addr %s272, 256
          %s274 = scalar_lea.vmem [#allocation2], %s273
          %s275 = sadd.s32 %s28, %s29
          %s276 = smul.u32 8, %s275
          %s278 = ssub.s32 4096, 4096
          %279 = vsyncadd %s271, %s278
          %s280 = smul.addr %s276, 4
          %s281 = smul.addr %s280, 128
          %s282 = scalar_lea.hbm %s0, %s281
          %s283 = sshll.u32 %s274, 4
          %s284 = int_to_ptr.vmem [resolvable:$true] %s283
          %289 = dma.hbm_to_vmem [thread:$0]  %s282, 4096, %s284, %s271, 256, 256, 16
        $region32: #{tpu_custom_call.1} parent=27 // pred_fallthru
          _
        // Predicated region
        $region33: #{tpu_custom_call.1} parent=27 // pred_check
          %p290 = pneg %p98
        $region34: #{tpu_custom_call.1} parent=27 // pred_check_branch
          %292 = sbr.rel (%p290) target = $region36
        $region35: #{tpu_custom_call.1} parent=27 // pred_region
          %s293 = sand.u32 %s21, 1
          %s294 = scalar_lea.sflag [#allocation6], %s293
          %s295 = sand.u32 %s88, 1
          %s296 = smul.addr %s295, 16
          %s297 = scalar_lea.vmem [#allocation5], %s296
          %s298 = sadd.s32 %s28, %s29
          %s299 = smul.u32 %s298, 8
          %s300 = ssub.s32 %s299, 1
          %p301 = scmp.gt.s32.totalorder %s300, 0
          %s302 = scalar_select %p301, %s300, 0
          %s304 = ssub.s32 256, 256
          %305 = vsyncadd %s294, %s304
          %s306 = smul.addr %s302, 4
          %s307 = sadd.s32 2, %s306
          %s308 = smul.addr %s307, 128
          %s309 = scalar_lea.hbm %s1, %s308
          %s311 = sshll.u32 %s297, 4
          %s312 = int_to_ptr.vmem [resolvable:$true] %s311
          %314 = dma.hbm_to_vmem [thread:$0]  %s309, 256, %s312, %s294
        $region36: #{tpu_custom_call.1} parent=27 // pred_fallthru
          _
      $region28: #{tpu_custom_call.1} parent=5 // pred_fallthru
        _
      %p315 = scmp.le.s32.totalorder 1, %s21
      %p316 = scmp.lt.s32.totalorder %s21, 3
      %p317 = pnand %p315, %p316
      %p318 = pneg %p317
      // Predicated region
      $region37: #{tpu_custom_call.1} parent=5 // pred_check
        _
      $region38: #{tpu_custom_call.1} parent=5 // pred_check_branch
        %320 = sbr.rel (%p317) target = $region40
      $region39: #{tpu_custom_call.1} parent=5 // pred_region
        %s321 = ssub.s32 %s21, 1
        %s322 = sand.u32 %s55, 1
        %s323 = scalar_lea.sflag [#allocation3], %s322
        %s324 = sand.u32 %s55, 1
        %s325 = smul.addr %s324, 256
        %s326 = scalar_lea.vmem [#allocation2], %s325
        // Predicated region
        $region41: #{tpu_custom_call.1} parent=39 // pred_check
          %p327 = pneg %p68
        $region42: #{tpu_custom_call.1} parent=39 // pred_check_branch
          %329 = sbr.rel (%p327) target = $region44
        $region43: #{tpu_custom_call.1} parent=39 // pred_region
          %330 = dma.done %s323, 4096
        $region44: #{tpu_custom_call.1} parent=39 // pred_fallthru
          _
        %s331 = sand.u32 %s26, 1
        %s332 = scalar_lea.sflag [#allocation6], %s331
        %s333 = sand.u32 %s91, 1
        %s334 = smul.addr %s333, 16
        %s335 = scalar_lea.vmem [#allocation5], %s334
        // Predicated region
        $region45: #{tpu_custom_call.1} parent=39 // pred_check
          %p336 = pneg %p104
        $region46: #{tpu_custom_call.1} parent=39 // pred_check_branch
          %338 = sbr.rel (%p336) target = $region48
        $region47: #{tpu_custom_call.1} parent=39 // pred_region
          %339 = dma.done %s332, 256
        $region48: #{tpu_custom_call.1} parent=39 // pred_fallthru
          _
        // Predicated region
        $region49: #{tpu_custom_call.1} parent=39 // pred_check
          %p340 = pneg %p130
        $region50: #{tpu_custom_call.1} parent=39 // pred_check_branch
          %342 = sbr.rel (%p340) target = $region52
        $region51: #{tpu_custom_call.1} parent=39 // pred_region
          %343 = dma.done [#allocation6], 6144
        $region52: #{tpu_custom_call.1} parent=39 // pred_fallthru
          _
        // Predicated region
        $region53: #{tpu_custom_call.1} parent=39 // pred_check
          %p344 = pneg %p156
        $region54: #{tpu_custom_call.1} parent=39 // pred_check_branch
          %346 = sbr.rel (%p344) target = $region56
        $region55: #{tpu_custom_call.1} parent=39 // pred_region
          %347 = dma.done [#allocation9], 3072
        $region56: #{tpu_custom_call.1} parent=39 // pred_fallthru
          _
        %s348 = sand.u32 %s55, 1
        %s349 = scalar_lea.sflag [#allocation3], %s348
        %s350 = sand.u32 %s55, 1
        %s351 = smul.addr %s350, 256
        %s352 = scalar_lea.vmem [#allocation2], %s351
        %p353 = pneg %p68
        %p354 = pneg %p65
        %s355 = sand.u32 %s26, 1
        %s356 = scalar_lea.sflag [#allocation6], %s355
        %s357 = sand.u32 %s91, 1
        %s358 = smul.addr %s357, 16
        %s359 = scalar_lea.vmem [#allocation5], %s358
        %p360 = pneg %p104
        %p361 = pneg %p101
        %p362 = pneg %p130
        %p363 = pneg %p127
        %p364 = pneg %p156
        %p365 = pneg %p153
        %p366 = scmp.lt.s32.totalorder %s33, 0
        %s367 = scalar_select %p366, %s33, 0
        %s368 = scalar_lea.vmem %s4, %s367
        %p369 = pneg %p182
        %p370 = pneg %p179
        %p371 = pneg %p212
        %p372 = pneg %p209
        %s373 = sand.u32 %s199, 1
        %s374 = scalar_lea.sflag [#allocation4], %s373
        %s375 = sand.u32 %s199, 1
        %s376 = smul.addr %s375, 64
        %s377 = scalar_lea.vmem [#allocation10], %s376
        %s378 = sadd.s32 %s31, %s32
        %s379 = smul.u32 8, %s378
        %s380 = sadd.s32 %s31, %s32
        %s381 = smul.u32 %s380, 8
        %s382 = ssub.s32 %s381, 1
        %p383 = scmp.gt.s32.totalorder %s382, 0
        %s384 = scalar_select %p383, %s382, 0
        %p385 = scmp.lt.s32.totalorder %s33, 0
        %s386 = scalar_select %p385, %s33, 0
        %s387 = scalar_lea.vmem %s4, %s386
        %s388 = sadd.s32 %s31, %s32
        %s389 = smul.u32 8, %s388
        %v391 = vld [vmem:[%s326] sm:$0xff]
        %v392 = vld [vmem:[%s326 + $0x8] sm:$0xff]
        %v393 = vld [vmem:[%s326 + $0x10] sm:$0xff]
        %v394 = vld [vmem:[%s326 + $0x18] sm:$0xff]
        %v395 = vld [vmem:[%s326 + $0x20] sm:$0xff]
        %v396 = vld [vmem:[%s326 + $0x28] sm:$0xff]
        %v397 = vld [vmem:[%s326 + $0x30] sm:$0xff]
        %v398 = vld [vmem:[%s326 + $0x38] sm:$0xff]
        %v399 = vld [vmem:[%s326 + $0x40] sm:$0xff]
        %v400 = vld [vmem:[%s326 + $0x48] sm:$0xff]
        %v401 = vld [vmem:[%s326 + $0x50] sm:$0xff]
        %v402 = vld [vmem:[%s326 + $0x58] sm:$0xff]
        %v403 = vld [vmem:[%s326 + $0x60] sm:$0xff]
        %v404 = vld [vmem:[%s326 + $0x68] sm:$0xff]
        %v405 = vld [vmem:[%s326 + $0x70] sm:$0xff]
        %v406 = vld [vmem:[%s326 + $0x78] sm:$0xff]
        %v407 = vld [vmem:[%s326 + $0x80] sm:$0xff]
        %v408 = vld [vmem:[%s326 + $0x88] sm:$0xff]
        %v409 = vld [vmem:[%s326 + $0x90] sm:$0xff]
        %v410 = vld [vmem:[%s326 + $0x98] sm:$0xff]
        %v411 = vld [vmem:[%s326 + $0xa0] sm:$0xff]
        %v412 = vld [vmem:[%s326 + $0xa8] sm:$0xff]
        %v413 = vld [vmem:[%s326 + $0xb0] sm:$0xff]
        %v414 = vld [vmem:[%s326 + $0xb8] sm:$0xff]
        %v415 = vld [vmem:[%s326 + $0xc0] sm:$0xff]
        %v416 = vld [vmem:[%s326 + $0xc8] sm:$0xff]
        %v417 = vld [vmem:[%s326 + $0xd0] sm:$0xff]
        %v418 = vld [vmem:[%s326 + $0xd8] sm:$0xff]
        %v419 = vld [vmem:[%s326 + $0xe0] sm:$0xff]
        %v420 = vld [vmem:[%s326 + $0xe8] sm:$0xff]
        %v421 = vld [vmem:[%s326 + $0xf0] sm:$0xff]
        %v422 = vld [vmem:[%s326 + $0xf8] sm:$0xff]
        %v423 = vpack.c.bf16 %v391, %v391
        %v424 = vpack.c.bf16 %v392, %v392
        %v425 = vpack.c.bf16 %v393, %v393
        %v426 = vpack.c.bf16 %v394, %v394
        %v427 = vpack.c.bf16 %v395, %v395
        %v428 = vpack.c.bf16 %v396, %v396
        %v429 = vpack.c.bf16 %v397, %v397
        %v430 = vpack.c.bf16 %v398, %v398
        %v431 = vpack.c.bf16 %v399, %v399
        %v432 = vpack.c.bf16 %v400, %v400
        %v433 = vpack.c.bf16 %v401, %v401
        %v434 = vpack.c.bf16 %v402, %v402
        %v435 = vpack.c.bf16 %v403, %v403
        %v436 = vpack.c.bf16 %v404, %v404
        %v437 = vpack.c.bf16 %v405, %v405
        %v438 = vpack.c.bf16 %v406, %v406
        %v439 = vpack.c.bf16 %v407, %v407
        %v440 = vpack.c.bf16 %v408, %v408
        %v441 = vpack.c.bf16 %v409, %v409
        %v442 = vpack.c.bf16 %v410, %v410
        %v443 = vpack.c.bf16 %v411, %v411
        %v444 = vpack.c.bf16 %v412, %v412
        %v445 = vpack.c.bf16 %v413, %v413
        %v446 = vpack.c.bf16 %v414, %v414
        %v447 = vpack.c.bf16 %v415, %v415
        %v448 = vpack.c.bf16 %v416, %v416
        %v449 = vpack.c.bf16 %v417, %v417
        %v450 = vpack.c.bf16 %v418, %v418
        %v451 = vpack.c.bf16 %v419, %v419
        %v452 = vpack.c.bf16 %v420, %v420
        %v453 = vpack.c.bf16 %v421, %v421
        %v454 = vpack.c.bf16 %v422, %v422
        %v471 = vunpack.c.l.b16 %v423
        %v472 = vunpack.c.l.b16 %v424
        %v473 = vunpack.c.l.b16 %v427
        %v474 = vunpack.c.l.b16 %v428
        %v475 = vunpack.c.l.b16 %v431
        %v476 = vunpack.c.l.b16 %v432
        %v477 = vunpack.c.l.b16 %v435
        %v478 = vunpack.c.l.b16 %v436
        %v479 = vunpack.c.l.b16 %v439
        %v480 = vunpack.c.l.b16 %v440
        %v481 = vunpack.c.l.b16 %v443
        %v482 = vunpack.c.l.b16 %v444
        %v483 = vunpack.c.l.b16 %v447
        %v484 = vunpack.c.l.b16 %v448
        %v485 = vunpack.c.l.b16 %v451
        %v486 = vunpack.c.l.b16 %v452
        %v503 = vunpack.c.l.b16 %v425
        %v504 = vunpack.c.l.b16 %v426
        %v505 = vunpack.c.l.b16 %v429
        %v506 = vunpack.c.l.b16 %v430
        %v507 = vunpack.c.l.b16 %v433
        %v508 = vunpack.c.l.b16 %v434
        %v509 = vunpack.c.l.b16 %v437
        %v510 = vunpack.c.l.b16 %v438
        %v511 = vunpack.c.l.b16 %v441
        %v512 = vunpack.c.l.b16 %v442
        %v513 = vunpack.c.l.b16 %v445
        %v514 = vunpack.c.l.b16 %v446
        %v515 = vunpack.c.l.b16 %v449
        %v516 = vunpack.c.l.b16 %v450
        %v517 = vunpack.c.l.b16 %v453
        %v518 = vunpack.c.l.b16 %v454
        %v519 = vlaneseq
        %v520 = vshrl.u32 %v519, 7
        %v521 = vadd.s32 %v520, 8
        %v522 = vadd.s32 %v520, 16
        %v523 = vadd.s32 %v520, 24
        %v524 = vadd.s32 %v520, 32
        %v525 = vadd.s32 %v520, 40
        %v526 = vadd.s32 %v520, 48
        %v527 = vadd.s32 %v520, 56
        %vm528 = vcmp.lt.s32.totalorder %v520, 8
        %vm529 = vcmp.lt.s32.totalorder %v521, 8
        %vm530 = vcmp.lt.s32.totalorder %v522, 8
        %vm531 = vcmp.lt.s32.totalorder %v523, 8
        %vm532 = vcmp.lt.s32.totalorder %v524, 8
        %vm533 = vcmp.lt.s32.totalorder %v525, 8
        %vm534 = vcmp.lt.s32.totalorder %v526, 8
        %vm535 = vcmp.lt.s32.totalorder %v527, 8
        %vm536 = vcmp.lt.s32.totalorder %v520, 0
        %v537 = vsub.s32 0, %v520
        %v538 = vsel %vm536, %v537, %v520
        %v539 = vshrl.u32 %v538, 3
        %v540 = vand.u32 %v538, 7
        %v541 = vsub.s32 0, %v540
        %v542 = vsel %vm536, %v541, %v540
        %vm543 = vcmp.lt.s32.totalorder %v521, 0
        %v544 = vsub.s32 0, %v521
        %v545 = vsel %vm543, %v544, %v521
        %v546 = vshrl.u32 %v545, 3
        %v547 = vand.u32 %v545, 7
        %v548 = vsub.s32 0, %v547
        %v549 = vsel %vm543, %v548, %v547
        %vm550 = vcmp.lt.s32.totalorder %v522, 0
        %v551 = vsub.s32 0, %v522
        %v552 = vsel %vm550, %v551, %v522
        %v553 = vshrl.u32 %v552, 3
        %v554 = vand.u32 %v552, 7
        %v555 = vsub.s32 0, %v554
        %v556 = vsel %vm550, %v555, %v554
        %vm557 = vcmp.lt.s32.totalorder %v523, 0
        %v558 = vsub.s32 0, %v523
        %v559 = vsel %vm557, %v558, %v523
        %v560 = vshrl.u32 %v559, 3
        %v561 = vand.u32 %v559, 7
        %v562 = vsub.s32 0, %v561
        %v563 = vsel %vm557, %v562, %v561
        %vm564 = vcmp.lt.s32.totalorder %v524, 0
        %v565 = vsub.s32 0, %v524
        %v566 = vsel %vm564, %v565, %v524
        %v567 = vshrl.u32 %v566, 3
        %v568 = vand.u32 %v566, 7
        %v569 = vsub.s32 0, %v568
        %v570 = vsel %vm564, %v569, %v568
        %vm571 = vcmp.lt.s32.totalorder %v525, 0
        %v572 = vsub.s32 0, %v525
        %v573 = vsel %vm571, %v572, %v525
        %v574 = vshrl.u32 %v573, 3
        %v575 = vand.u32 %v573, 7
        %v576 = vsub.s32 0, %v575
        %v577 = vsel %vm571, %v576, %v575
        %vm578 = vcmp.lt.s32.totalorder %v526, 0
        %v579 = vsub.s32 0, %v526
        %v580 = vsel %vm578, %v579, %v526
        %v581 = vshrl.u32 %v580, 3
        %v582 = vand.u32 %v580, 7
        %v583 = vsub.s32 0, %v582
        %v584 = vsel %vm578, %v583, %v582
        %vm585 = vcmp.lt.s32.totalorder %v527, 0
        %v586 = vsub.s32 0, %v527
        %v587 = vsel %vm585, %v586, %v527
        %v588 = vshrl.u32 %v587, 3
        %v589 = vand.u32 %v587, 7
        %v590 = vsub.s32 0, %v589
        %v591 = vsel %vm585, %v590, %v589
        %vm592 = vcmp.ne.s32.totalorder %v542, 0
        %vm593 = vcmp.ne.s32.totalorder %v549, 0
        %vm594 = vcmp.ne.s32.totalorder %v556, 0
        %vm595 = vcmp.ne.s32.totalorder %v563, 0
        %vm596 = vcmp.ne.s32.totalorder %v570, 0
        %vm597 = vcmp.ne.s32.totalorder %v577, 0
        %vm598 = vcmp.ne.s32.totalorder %v584, 0
        %vm599 = vcmp.ne.s32.totalorder %v591, 0
        %vm600 = vcmp.lt.s32.totalorder %v542, 0
        %vm601 = vcmp.lt.s32.totalorder %v549, 0
        %vm602 = vcmp.lt.s32.totalorder %v556, 0
        %vm603 = vcmp.lt.s32.totalorder %v563, 0
        %vm604 = vcmp.lt.s32.totalorder %v570, 0
        %vm605 = vcmp.lt.s32.totalorder %v577, 0
        %vm606 = vcmp.lt.s32.totalorder %v584, 0
        %vm607 = vcmp.lt.s32.totalorder %v591, 0
        %vm608 = vmand %vm600, %vm592
        %vm609 = vmand %vm601, %vm593
        %vm610 = vmand %vm602, %vm594
        %vm611 = vmand %vm603, %vm595
        %vm612 = vmand %vm604, %vm596
        %vm613 = vmand %vm605, %vm597
        %vm614 = vmand %vm606, %vm598
        %vm615 = vmand %vm607, %vm599
        %v616 = vadd.s32 %v542, 8
        %v617 = vadd.s32 %v549, 8
        %v618 = vadd.s32 %v556, 8
        %v619 = vadd.s32 %v563, 8
        %v620 = vadd.s32 %v570, 8
        %v621 = vadd.s32 %v577, 8
        %v622 = vadd.s32 %v584, 8
        %v623 = vadd.s32 %v591, 8
        %v624 = vsel %vm608, %v616, %v542
        %v625 = vsel %vm609, %v617, %v549
        %v626 = vsel %vm610, %v618, %v556
        %v627 = vsel %vm611, %v619, %v563
        %v628 = vsel %vm612, %v620, %v570
        %v629 = vsel %vm613, %v621, %v577
        %v630 = vsel %vm614, %v622, %v584
        %v631 = vsel %vm615, %v623, %v591
        %vm632 = vcmp.eq.s32.totalorder %v624, 0
        %vm633 = vcmp.eq.s32.totalorder %v625, 0
        %vm634 = vcmp.eq.s32.totalorder %v626, 0
        %vm635 = vcmp.eq.s32.totalorder %v627, 0
        %vm636 = vcmp.eq.s32.totalorder %v628, 0
        %vm637 = vcmp.eq.s32.totalorder %v629, 0
        %vm638 = vcmp.eq.s32.totalorder %v630, 0
        %vm639 = vcmp.eq.s32.totalorder %v631, 0
        %s640 = scalar_lea.vmem [#allocation7], 128
        %v641 = vld [vmem:[%s640] sm:$0xf]
        %v642 = vld [vmem:[%s640 + $0x4] sm:$0xf]
        %v643 = vld [vmem:[%s640 + $0x8] sm:$0xf]
        %v644 = vld [vmem:[%s640 + $0xc] sm:$0xf]
        %v645 = vld [vmem:[%s640 + $0x10] sm:$0xf]
        %v646 = vld [vmem:[%s640 + $0x14] sm:$0xf]
        %v647 = vld [vmem:[%s640 + $0x18] sm:$0xf]
        %v648 = vld [vmem:[%s640 + $0x1c] sm:$0xf]
        %v649 = vld [vmem:[%s640 + $0x20] sm:$0xf]
        %v650 = vld [vmem:[%s640 + $0x24] sm:$0xf]
        %v651 = vld [vmem:[%s640 + $0x28] sm:$0xf]
        %v652 = vld [vmem:[%s640 + $0x2c] sm:$0xf]
        %v653 = vld [vmem:[%s640 + $0x30] sm:$0xf]
        %v654 = vld [vmem:[%s640 + $0x34] sm:$0xf]
        %v655 = vld [vmem:[%s640 + $0x38] sm:$0xf]
        %v656 = vld [vmem:[%s640 + $0x3c] sm:$0xf]
        %v657 = vld [vmem:[%s640 + $0x40] sm:$0xf]
        %v658 = vld [vmem:[%s640 + $0x44] sm:$0xf]
        %v659 = vld [vmem:[%s640 + $0x48] sm:$0xf]
        %v660 = vld [vmem:[%s640 + $0x4c] sm:$0xf]
        %v661 = vld [vmem:[%s640 + $0x50] sm:$0xf]
        %v662 = vld [vmem:[%s640 + $0x54] sm:$0xf]
        %v663 = vld [vmem:[%s640 + $0x58] sm:$0xf]
        %v664 = vld [vmem:[%s640 + $0x5c] sm:$0xf]
        %v665 = vld [vmem:[%s640 + $0x60] sm:$0xf]
        %v666 = vld [vmem:[%s640 + $0x64] sm:$0xf]
        %v667 = vld [vmem:[%s640 + $0x68] sm:$0xf]
        %v668 = vld [vmem:[%s640 + $0x6c] sm:$0xf]
        %v669 = vld [vmem:[%s640 + $0x70] sm:$0xf]
        %v670 = vld [vmem:[%s640 + $0x74] sm:$0xf]
        %v671 = vld [vmem:[%s640 + $0x78] sm:$0xf]
        %v672 = vld [vmem:[%s640 + $0x7c] sm:$0xf]
        %v673 = vld [vmem:[%s387] sm:$0x1]
        %v675 = vlaneseq
        %v676 = vshrl.u32 %v675, 7
        %v677 = vsub.s32 0, %v676
        %v678 = vrot.slane %v673, %v677
        %v680 = vpack.c.b16 %v473, %v471
        %v681 = vpack.c.b16 %v474, %v472
        %v682 = vpack.c.b16 %v477, %v475
        %v683 = vpack.c.b16 %v478, %v476
        %v684 = vpack.c.b16 %v481, %v479
        %v685 = vpack.c.b16 %v482, %v480
        %v686 = vpack.c.b16 %v485, %v483
        %v687 = vpack.c.b16 %v486, %v484
        %v728 = vunpack.c.l.b16 %v641
        %v729 = vunpack.c.l.b16 %v642
        %v730 = vunpack.c.l.b16 %v643
        %v731 = vunpack.c.l.b16 %v644
        %v732 = vunpack.c.l.b16 %v645
        %v733 = vunpack.c.l.b16 %v646
        %v734 = vunpack.c.l.b16 %v647
        %v735 = vunpack.c.l.b16 %v648
        %v736 = vunpack.c.l.b16 %v649
        %v737 = vunpack.c.l.b16 %v650
        %v738 = vunpack.c.l.b16 %v651
        %v739 = vunpack.c.l.b16 %v652
        %v740 = vunpack.c.l.b16 %v653
        %v741 = vunpack.c.l.b16 %v654
        %v742 = vunpack.c.l.b16 %v655
        %v743 = vunpack.c.l.b16 %v656
        %v744 = vunpack.c.l.b16 %v657
        %v745 = vunpack.c.l.b16 %v658
        %v746 = vunpack.c.l.b16 %v659
        %v747 = vunpack.c.l.b16 %v660
        %v748 = vunpack.c.l.b16 %v661
        %v749 = vunpack.c.l.b16 %v662
        %v750 = vunpack.c.l.b16 %v663
        %v751 = vunpack.c.l.b16 %v664
        %v752 = vunpack.c.l.b16 %v665
        %v753 = vunpack.c.l.b16 %v666
        %v754 = vunpack.c.l.b16 %v667
        %v755 = vunpack.c.l.b16 %v668
        %v756 = vunpack.c.l.b16 %v669
        %v757 = vunpack.c.l.b16 %v670
        %v758 = vunpack.c.l.b16 %v671
        %v759 = vunpack.c.l.b16 %v672
        %v760 = vpack.c.b16 %v729, %v728
        %v761 = vpack.c.b16 %v731, %v730
        %v762 = vpack.c.b16 %v733, %v732
        %v763 = vpack.c.b16 %v735, %v734
        %v764 = vpack.c.b16 %v737, %v736
        %v765 = vpack.c.b16 %v739, %v738
        %v766 = vpack.c.b16 %v741, %v740
        %v767 = vpack.c.b16 %v743, %v742
        %v768 = vpack.c.b16 %v745, %v744
        %v769 = vpack.c.b16 %v747, %v746
        %v770 = vpack.c.b16 %v749, %v748
        %v771 = vpack.c.b16 %v751, %v750
        %v772 = vpack.c.b16 %v753, %v752
        %v773 = vpack.c.b16 %v755, %v754
        %v774 = vpack.c.b16 %v757, %v756
        %v775 = vpack.c.b16 %v759, %v758
        %792 = vmatprep.subr.bf16.mxu0 0
        %793 = vmatpush1.bf16.msra.mxu0 %v767
        %794 = vmatprep.subr.bf16.mxu0 0
        %795 = vmatpush1.bf16.msra.mxu0 %v766
        %796 = vmatprep.subr.bf16.mxu0 0
        %797 = vmatpush1.bf16.msra.mxu0 %v765
        %798 = vmatprep.subr.bf16.mxu0 0
        %799 = vmatpush1.bf16.msra.mxu0 %v764
        %800 = vmatprep.subr.bf16.mxu0 0
        %801 = vmatpush1.bf16.msra.mxu0 %v763
        %802 = vmatprep.subr.bf16.mxu0 0
        %803 = vmatpush1.bf16.msra.mxu0 %v762
        %804 = vmatprep.subr.bf16.mxu0 0
        %805 = vmatpush1.bf16.msra.mxu0 %v761
        %806 = vmatprep.subr.bf16.mxu0 0
        %807 = vmatpush1.bf16.msra.mxu0 %v760
        %808 = vmatprep.subr.bf16.mxu0 0
        %809 = vmatpush2.bf16.msra.mxu0 %v775
        %810 = vmatprep.subr.bf16.mxu0 0
        %811 = vmatpush2.bf16.msra.mxu0 %v774
        %812 = vmatprep.subr.bf16.mxu0 0
        %813 = vmatpush2.bf16.msra.mxu0 %v773
        %814 = vmatprep.subr.bf16.mxu0 0
        %815 = vmatpush2.bf16.msra.mxu0 %v772
        %816 = vmatprep.subr.bf16.mxu0 0
        %817 = vmatpush2.bf16.msra.mxu0 %v771
        %818 = vmatprep.subr.bf16.mxu0 0
        %819 = vmatpush2.bf16.msra.mxu0 %v770
        %820 = vmatprep.subr.bf16.mxu0 0
        %821 = vmatpush2.bf16.msra.mxu0 %v769
        %822 = vmatprep.subr.bf16.mxu0 0
        %823 = vmatpush2.bf16.msra.mxu0 %v768
        %824 = vmatprep.mubr.bf16.mxu0 %v681
        %825 = vmatmul.mubr.bf16.gmra.mxu0 %v680
        %v826 = vpop.f32.mrf.mxu0
        %v827 = vadd.f32 %v678, %v826
        %v828 = vpop.f32.mrf.mxu0
        %v829 = vpop.f32.mrf.mxu0
        %v830 = vadd.f32 %v678, %v829
        %v831 = vpop.f32.mrf.mxu0
        %832 = vmatprep.mubr.bf16.mxu0 %v683
        %833 = vmatmul.mubr.bf16.gmra.mxu0 %v682
        %v834 = vpop.f32.mrf.mxu0
        %v835 = vadd.f32 %v678, %v834
        %v836 = vpop.f32.mrf.mxu0
        %v837 = vpop.f32.mrf.mxu0
        %v838 = vadd.f32 %v678, %v837
        %v839 = vpop.f32.mrf.mxu0
        %840 = vmatprep.mubr.bf16.mxu0 %v685
        %841 = vmatmul.mubr.bf16.gmra.mxu0 %v684
        %v842 = vpop.f32.mrf.mxu0
        %v843 = vadd.f32 %v678, %v842
        %v844 = vpop.f32.mrf.mxu0
        %v845 = vpop.f32.mrf.mxu0
        %v846 = vadd.f32 %v678, %v845
        %v847 = vpop.f32.mrf.mxu0
        %848 = vmatprep.mubr.bf16.mxu0 %v687
        %849 = vmatmul.mubr.bf16.gmra.mxu0 %v686
        %v850 = vpop.f32.mrf.mxu0
        %v851 = vadd.f32 %v678, %v850
        %v852 = vpop.f32.mrf.mxu0
        %v853 = vpop.f32.mrf.mxu0
        %v854 = vadd.f32 %v678, %v853
        %v855 = vpop.f32.mrf.mxu0
        %856 = vdwg.mxu0
        %857 = vst [vmem:[%s377] sm:$0xff] %v827
        %858 = vst [vmem:[%s377 + $0x8] sm:$0xff] %v830
        %859 = vst [vmem:[%s377 + $0x10] sm:$0xff] %v835
        %860 = vst [vmem:[%s377 + $0x18] sm:$0xff] %v838
        %861 = vst [vmem:[%s377 + $0x20] sm:$0xff] %v843
        %862 = vst [vmem:[%s377 + $0x28] sm:$0xff] %v846
        %863 = vst [vmem:[%s377 + $0x30] sm:$0xff] %v851
        %864 = vst [vmem:[%s377 + $0x38] sm:$0xff] %v854
        %v865 = vld [vmem:[%s377] sm:$0xff]
        %v866 = vld [vmem:[%s377 + $0x8] sm:$0xff]
        %v867 = vld [vmem:[%s377 + $0x10] sm:$0xff]
        %v868 = vld [vmem:[%s377 + $0x18] sm:$0xff]
        %v869 = vld [vmem:[%s377 + $0x20] sm:$0xff]
        %v870 = vld [vmem:[%s377 + $0x28] sm:$0xff]
        %v871 = vld [vmem:[%s377 + $0x30] sm:$0xff]
        %v872 = vld [vmem:[%s377 + $0x38] sm:$0xff]
        %s873 = scalar_lea.vmem [#allocation7], 256
        %v874 = vld [vmem:[%s873] sm:$0xf]
        %v875 = vld [vmem:[%s873 + $0x4] sm:$0xf]
        %v876 = vld [vmem:[%s873 + $0x8] sm:$0xf]
        %v877 = vld [vmem:[%s873 + $0xc] sm:$0xf]
        %v878 = vld [vmem:[%s873 + $0x10] sm:$0xf]
        %v879 = vld [vmem:[%s873 + $0x14] sm:$0xf]
        %v880 = vld [vmem:[%s873 + $0x18] sm:$0xf]
        %v881 = vld [vmem:[%s873 + $0x1c] sm:$0xf]
        %v882 = vld [vmem:[%s873 + $0x20] sm:$0xf]
        %v883 = vld [vmem:[%s873 + $0x24] sm:$0xf]
        %v884 = vld [vmem:[%s873 + $0x28] sm:$0xf]
        %v885 = vld [vmem:[%s873 + $0x2c] sm:$0xf]
        %v886 = vld [vmem:[%s873 + $0x30] sm:$0xf]
        %v887 = vld [vmem:[%s873 + $0x34] sm:$0xf]
        %v888 = vld [vmem:[%s873 + $0x38] sm:$0xf]
        %v889 = vld [vmem:[%s873 + $0x3c] sm:$0xf]
        %v890 = vld [vmem:[%s873 + $0x40] sm:$0xf]
        %v891 = vld [vmem:[%s873 + $0x44] sm:$0xf]
        %v892 = vld [vmem:[%s873 + $0x48] sm:$0xf]
        %v893 = vld [vmem:[%s873 + $0x4c] sm:$0xf]
        %v894 = vld [vmem:[%s873 + $0x50] sm:$0xf]
        %v895 = vld [vmem:[%s873 + $0x54] sm:$0xf]
        %v896 = vld [vmem:[%s873 + $0x58] sm:$0xf]
        %v897 = vld [vmem:[%s873 + $0x5c] sm:$0xf]
        %v898 = vld [vmem:[%s873 + $0x60] sm:$0xf]
        %v899 = vld [vmem:[%s873 + $0x64] sm:$0xf]
        %v900 = vld [vmem:[%s873 + $0x68] sm:$0xf]
        %v901 = vld [vmem:[%s873 + $0x6c] sm:$0xf]
        %v902 = vld [vmem:[%s873 + $0x70] sm:$0xf]
        %v903 = vld [vmem:[%s873 + $0x74] sm:$0xf]
        %v904 = vld [vmem:[%s873 + $0x78] sm:$0xf]
        %v905 = vld [vmem:[%s873 + $0x7c] sm:$0xf]
        %v906 = vpack.c.b16 %v505, %v503
        %v907 = vpack.c.b16 %v506, %v504
        %v908 = vpack.c.b16 %v509, %v507
        %v909 = vpack.c.b16 %v510, %v508
        %v910 = vpack.c.b16 %v513, %v511
        %v911 = vpack.c.b16 %v514, %v512
        %v912 = vpack.c.b16 %v517, %v515
        %v913 = vpack.c.b16 %v518, %v516
        %v954 = vunpack.c.l.b16 %v874
        %v955 = vunpack.c.l.b16 %v875
        %v956 = vunpack.c.l.b16 %v876
        %v957 = vunpack.c.l.b16 %v877
        %v958 = vunpack.c.l.b16 %v878
        %v959 = vunpack.c.l.b16 %v879
        %v960 = vunpack.c.l.b16 %v880
        %v961 = vunpack.c.l.b16 %v881
        %v962 = vunpack.c.l.b16 %v882
        %v963 = vunpack.c.l.b16 %v883
        %v964 = vunpack.c.l.b16 %v884
        %v965 = vunpack.c.l.b16 %v885
        %v966 = vunpack.c.l.b16 %v886
        %v967 = vunpack.c.l.b16 %v887
        %v968 = vunpack.c.l.b16 %v888
        %v969 = vunpack.c.l.b16 %v889
        %v970 = vunpack.c.l.b16 %v890
        %v971 = vunpack.c.l.b16 %v891
        %v972 = vunpack.c.l.b16 %v892
        %v973 = vunpack.c.l.b16 %v893
        %v974 = vunpack.c.l.b16 %v894
        %v975 = vunpack.c.l.b16 %v895
        %v976 = vunpack.c.l.b16 %v896
        %v977 = vunpack.c.l.b16 %v897
        %v978 = vunpack.c.l.b16 %v898
        %v979 = vunpack.c.l.b16 %v899
        %v980 = vunpack.c.l.b16 %v900
        %v981 = vunpack.c.l.b16 %v901
        %v982 = vunpack.c.l.b16 %v902
        %v983 = vunpack.c.l.b16 %v903
        %v984 = vunpack.c.l.b16 %v904
        %v985 = vunpack.c.l.b16 %v905
        %v986 = vpack.c.b16 %v955, %v954
        %v987 = vpack.c.b16 %v957, %v956
        %v988 = vpack.c.b16 %v959, %v958
        %v989 = vpack.c.b16 %v961, %v960
        %v990 = vpack.c.b16 %v963, %v962
        %v991 = vpack.c.b16 %v965, %v964
        %v992 = vpack.c.b16 %v967, %v966
        %v993 = vpack.c.b16 %v969, %v968
        %v994 = vpack.c.b16 %v971, %v970
        %v995 = vpack.c.b16 %v973, %v972
        %v996 = vpack.c.b16 %v975, %v974
        %v997 = vpack.c.b16 %v977, %v976
        %v998 = vpack.c.b16 %v979, %v978
        %v999 = vpack.c.b16 %v981, %v980
        %v1000 = vpack.c.b16 %v983, %v982
        %v1001 = vpack.c.b16 %v985, %v984
        %1018 = vmatprep.subr.bf16.mxu0 0
        %1019 = vmatpush1.bf16.msra.mxu0 %v993
        %1020 = vmatprep.subr.bf16.mxu0 0
        %1021 = vmatpush1.bf16.msra.mxu0 %v992
        %1022 = vmatprep.subr.bf16.mxu0 0
        %1023 = vmatpush1.bf16.msra.mxu0 %v991
        %1024 = vmatprep.subr.bf16.mxu0 0
        %1025 = vmatpush1.bf16.msra.mxu0 %v990
        %1026 = vmatprep.subr.bf16.mxu0 0
        %1027 = vmatpush1.bf16.msra.mxu0 %v989
        %1028 = vmatprep.subr.bf16.mxu0 0
        %1029 = vmatpush1.bf16.msra.mxu0 %v988
        %1030 = vmatprep.subr.bf16.mxu0 0
        %1031 = vmatpush1.bf16.msra.mxu0 %v987
        %1032 = vmatprep.subr.bf16.mxu0 0
        %1033 = vmatpush1.bf16.msra.mxu0 %v986
        %1034 = vmatprep.subr.bf16.mxu0 0
        %1035 = vmatpush2.bf16.msra.mxu0 %v1001
        %1036 = vmatprep.subr.bf16.mxu0 0
        %1037 = vmatpush2.bf16.msra.mxu0 %v1000
        %1038 = vmatprep.subr.bf16.mxu0 0
        %1039 = vmatpush2.bf16.msra.mxu0 %v999
        %1040 = vmatprep.subr.bf16.mxu0 0
        %1041 = vmatpush2.bf16.msra.mxu0 %v998
        %1042 = vmatprep.subr.bf16.mxu0 0
        %1043 = vmatpush2.bf16.msra.mxu0 %v997
        %1044 = vmatprep.subr.bf16.mxu0 0
        %1045 = vmatpush2.bf16.msra.mxu0 %v996
        %1046 = vmatprep.subr.bf16.mxu0 0
        %1047 = vmatpush2.bf16.msra.mxu0 %v995
        %1048 = vmatprep.subr.bf16.mxu0 0
        %1049 = vmatpush2.bf16.msra.mxu0 %v994
        %1050 = vmatprep.mubr.bf16.mxu0 %v907
        %1051 = vmatmul.mubr.bf16.gmra.mxu0 %v906
        %v1052 = vpop.f32.mrf.mxu0
        %v1053 = vadd.f32 0.0, %v1052
        %v1054 = vpop.f32.mrf.mxu0
        %v1055 = vpop.f32.mrf.mxu0
        %v1056 = vadd.f32 0.0, %v1055
        %v1057 = vpop.f32.mrf.mxu0
        %1058 = vmatprep.mubr.bf16.mxu0 %v909
        %1059 = vmatmul.mubr.bf16.gmra.mxu0 %v908
        %v1060 = vpop.f32.mrf.mxu0
        %v1061 = vadd.f32 0.0, %v1060
        %v1062 = vpop.f32.mrf.mxu0
        %v1063 = vpop.f32.mrf.mxu0
        %v1064 = vadd.f32 0.0, %v1063
        %v1065 = vpop.f32.mrf.mxu0
        %1066 = vmatprep.mubr.bf16.mxu0 %v911
        %1067 = vmatmul.mubr.bf16.gmra.mxu0 %v910
        %v1068 = vpop.f32.mrf.mxu0
        %v1069 = vadd.f32 0.0, %v1068
        %v1070 = vpop.f32.mrf.mxu0
        %v1071 = vpop.f32.mrf.mxu0
        %v1072 = vadd.f32 0.0, %v1071
        %v1073 = vpop.f32.mrf.mxu0
        %1074 = vmatprep.mubr.bf16.mxu0 %v913
        %1075 = vmatmul.mubr.bf16.gmra.mxu0 %v912
        %v1076 = vpop.f32.mrf.mxu0
        %v1077 = vadd.f32 0.0, %v1076
        %v1078 = vpop.f32.mrf.mxu0
        %v1079 = vpop.f32.mrf.mxu0
        %v1080 = vadd.f32 0.0, %v1079
        %v1081 = vpop.f32.mrf.mxu0
        %1082 = vdwg.mxu0
        %v1083 = vadd.f32 %v865, %v1053
        %v1084 = vadd.f32 %v866, %v1056
        %v1085 = vadd.f32 %v867, %v1061
        %v1086 = vadd.f32 %v868, %v1064
        %v1087 = vadd.f32 %v869, %v1069
        %v1088 = vadd.f32 %v870, %v1072
        %v1089 = vadd.f32 %v871, %v1077
        %v1090 = vadd.f32 %v872, %v1080
        %1091 = vst [vmem:[%s377] sm:$0xff] %v1083
        %1092 = vst [vmem:[%s377 + $0x8] sm:$0xff] %v1084
        %1093 = vst [vmem:[%s377 + $0x10] sm:$0xff] %v1085
        %1094 = vst [vmem:[%s377 + $0x18] sm:$0xff] %v1086
        %1095 = vst [vmem:[%s377 + $0x20] sm:$0xff] %v1087
        %1096 = vst [vmem:[%s377 + $0x28] sm:$0xff] %v1088
        %1097 = vst [vmem:[%s377 + $0x30] sm:$0xff] %v1089
        %1098 = vst [vmem:[%s377 + $0x38] sm:$0xff] %v1090
        %v1099 = vld [vmem:[#allocation7] sm:$0xf]
        %v1100 = vld [vmem:[#allocation7 + $0x4] sm:$0xf]
        %v1101 = vld [vmem:[#allocation7 + $0x8] sm:$0xf]
        %v1102 = vld [vmem:[#allocation7 + $0xc] sm:$0xf]
        %v1103 = vld [vmem:[#allocation7 + $0x10] sm:$0xf]
        %v1104 = vld [vmem:[#allocation7 + $0x14] sm:$0xf]
        %v1105 = vld [vmem:[#allocation7 + $0x18] sm:$0xf]
        %v1106 = vld [vmem:[#allocation7 + $0x1c] sm:$0xf]
        %v1107 = vld [vmem:[#allocation7 + $0x20] sm:$0xf]
        %v1108 = vld [vmem:[#allocation7 + $0x24] sm:$0xf]
        %v1109 = vld [vmem:[#allocation7 + $0x28] sm:$0xf]
        %v1110 = vld [vmem:[#allocation7 + $0x2c] sm:$0xf]
        %v1111 = vld [vmem:[#allocation7 + $0x30] sm:$0xf]
        %v1112 = vld [vmem:[#allocation7 + $0x34] sm:$0xf]
        %v1113 = vld [vmem:[#allocation7 + $0x38] sm:$0xf]
        %v1114 = vld [vmem:[#allocation7 + $0x3c] sm:$0xf]
        %v1115 = vld [vmem:[#allocation7 + $0x40] sm:$0xf]
        %v1116 = vld [vmem:[#allocation7 + $0x44] sm:$0xf]
        %v1117 = vld [vmem:[#allocation7 + $0x48] sm:$0xf]
        %v1118 = vld [vmem:[#allocation7 + $0x4c] sm:$0xf]
        %v1119 = vld [vmem:[#allocation7 + $0x50] sm:$0xf]
        %v1120 = vld [vmem:[#allocation7 + $0x54] sm:$0xf]
        %v1121 = vld [vmem:[#allocation7 + $0x58] sm:$0xf]
        %v1122 = vld [vmem:[#allocation7 + $0x5c] sm:$0xf]
        %v1123 = vld [vmem:[#allocation7 + $0x60] sm:$0xf]
        %v1124 = vld [vmem:[#allocation7 + $0x64] sm:$0xf]
        %v1125 = vld [vmem:[#allocation7 + $0x68] sm:$0xf]
        %v1126 = vld [vmem:[#allocation7 + $0x6c] sm:$0xf]
        %v1127 = vld [vmem:[#allocation7 + $0x70] sm:$0xf]
        %v1128 = vld [vmem:[#allocation7 + $0x74] sm:$0xf]
        %v1129 = vld [vmem:[#allocation7 + $0x78] sm:$0xf]
        %v1130 = vld [vmem:[#allocation7 + $0x7c] sm:$0xf]
        %v1163 = vunpack.c.l.b16 %v1099
        %v1164 = vunpack.c.l.b16 %v1100
        %v1165 = vunpack.c.l.b16 %v1101
        %v1166 = vunpack.c.l.b16 %v1102
        %v1167 = vunpack.c.l.b16 %v1103
        %v1168 = vunpack.c.l.b16 %v1104
        %v1169 = vunpack.c.l.b16 %v1105
        %v1170 = vunpack.c.l.b16 %v1106
        %v1171 = vunpack.c.l.b16 %v1107
        %v1172 = vunpack.c.l.b16 %v1108
        %v1173 = vunpack.c.l.b16 %v1109
        %v1174 = vunpack.c.l.b16 %v1110
        %v1175 = vunpack.c.l.b16 %v1111
        %v1176 = vunpack.c.l.b16 %v1112
        %v1177 = vunpack.c.l.b16 %v1113
        %v1178 = vunpack.c.l.b16 %v1114
        %v1179 = vunpack.c.l.b16 %v1115
        %v1180 = vunpack.c.l.b16 %v1116
        %v1181 = vunpack.c.l.b16 %v1117
        %v1182 = vunpack.c.l.b16 %v1118
        %v1183 = vunpack.c.l.b16 %v1119
        %v1184 = vunpack.c.l.b16 %v1120
        %v1185 = vunpack.c.l.b16 %v1121
        %v1186 = vunpack.c.l.b16 %v1122
        %v1187 = vunpack.c.l.b16 %v1123
        %v1188 = vunpack.c.l.b16 %v1124
        %v1189 = vunpack.c.l.b16 %v1125
        %v1190 = vunpack.c.l.b16 %v1126
        %v1191 = vunpack.c.l.b16 %v1127
        %v1192 = vunpack.c.l.b16 %v1128
        %v1193 = vunpack.c.l.b16 %v1129
        %v1194 = vunpack.c.l.b16 %v1130
        %v1195 = vpack.c.b16 %v1164, %v1163
        %v1196 = vpack.c.b16 %v1166, %v1165
        %v1197 = vpack.c.b16 %v1168, %v1167
        %v1198 = vpack.c.b16 %v1170, %v1169
        %v1199 = vpack.c.b16 %v1172, %v1171
        %v1200 = vpack.c.b16 %v1174, %v1173
        %v1201 = vpack.c.b16 %v1176, %v1175
        %v1202 = vpack.c.b16 %v1178, %v1177
        %v1203 = vpack.c.b16 %v1180, %v1179
        %v1204 = vpack.c.b16 %v1182, %v1181
        %v1205 = vpack.c.b16 %v1184, %v1183
        %v1206 = vpack.c.b16 %v1186, %v1185
        %v1207 = vpack.c.b16 %v1188, %v1187
        %v1208 = vpack.c.b16 %v1190, %v1189
        %v1209 = vpack.c.b16 %v1192, %v1191
        %v1210 = vpack.c.b16 %v1194, %v1193
        %1227 = vmatprep.subr.bf16.mxu0 0
        %1228 = vmatpush1.bf16.msra.mxu0 %v1202
        %1229 = vmatprep.subr.bf16.mxu0 0
        %1230 = vmatpush1.bf16.msra.mxu0 %v1201
        %1231 = vmatprep.subr.bf16.mxu0 0
        %1232 = vmatpush1.bf16.msra.mxu0 %v1200
        %1233 = vmatprep.subr.bf16.mxu0 0
        %1234 = vmatpush1.bf16.msra.mxu0 %v1199
        %1235 = vmatprep.subr.bf16.mxu0 0
        %1236 = vmatpush1.bf16.msra.mxu0 %v1198
        %1237 = vmatprep.subr.bf16.mxu0 0
        %1238 = vmatpush1.bf16.msra.mxu0 %v1197
        %1239 = vmatprep.subr.bf16.mxu0 0
        %1240 = vmatpush1.bf16.msra.mxu0 %v1196
        %1241 = vmatprep.subr.bf16.mxu0 0
        %1242 = vmatpush1.bf16.msra.mxu0 %v1195
        %1243 = vmatprep.subr.bf16.mxu0 0
        %1244 = vmatpush2.bf16.msra.mxu0 %v1210
        %1245 = vmatprep.subr.bf16.mxu0 0
        %1246 = vmatpush2.bf16.msra.mxu0 %v1209
        %1247 = vmatprep.subr.bf16.mxu0 0
        %1248 = vmatpush2.bf16.msra.mxu0 %v1208
        %1249 = vmatprep.subr.bf16.mxu0 0
        %1250 = vmatpush2.bf16.msra.mxu0 %v1207
        %1251 = vmatprep.subr.bf16.mxu0 0
        %1252 = vmatpush2.bf16.msra.mxu0 %v1206
        %1253 = vmatprep.subr.bf16.mxu0 0
        %1254 = vmatpush2.bf16.msra.mxu0 %v1205
        %1255 = vmatprep.subr.bf16.mxu0 0
        %1256 = vmatpush2.bf16.msra.mxu0 %v1204
        %1257 = vmatprep.subr.bf16.mxu0 0
        %1258 = vmatpush2.bf16.msra.mxu0 %v1203
        %1259 = vmatprep.mubr.bf16.mxu0 %v907
        %1260 = vmatmul.mubr.bf16.gmra.mxu0 %v906
        %v1261 = vpop.f32.mrf.mxu0
        %v1262 = vadd.f32 0.0, %v1261
        %v1263 = vpop.f32.mrf.mxu0
        %v1264 = vpop.f32.mrf.mxu0
        %v1265 = vadd.f32 0.0, %v1264
        %v1266 = vpop.f32.mrf.mxu0
        %1267 = vmatprep.mubr.bf16.mxu0 %v909
        %1268 = vmatmul.mubr.bf16.gmra.mxu0 %v908
        %v1269 = vpop.f32.mrf.mxu0
        %v1270 = vadd.f32 0.0, %v1269
        %v1271 = vpop.f32.mrf.mxu0
        %v1272 = vpop.f32.mrf.mxu0
        %v1273 = vadd.f32 0.0, %v1272
        %v1274 = vpop.f32.mrf.mxu0
        %1275 = vmatprep.mubr.bf16.mxu0 %v911
        %1276 = vmatmul.mubr.bf16.gmra.mxu0 %v910
        %v1277 = vpop.f32.mrf.mxu0
        %v1278 = vadd.f32 0.0, %v1277
        %v1279 = vpop.f32.mrf.mxu0
        %v1280 = vpop.f32.mrf.mxu0
        %v1281 = vadd.f32 0.0, %v1280
        %v1282 = vpop.f32.mrf.mxu0
        %1283 = vmatprep.mubr.bf16.mxu0 %v913
        %1284 = vmatmul.mubr.bf16.gmra.mxu0 %v912
        %v1285 = vpop.f32.mrf.mxu0
        %v1286 = vadd.f32 0.0, %v1285
        %v1287 = vpop.f32.mrf.mxu0
        %v1288 = vpop.f32.mrf.mxu0
        %v1289 = vadd.f32 0.0, %v1288
        %v1290 = vpop.f32.mrf.mxu0
        %1291 = vdwg.mxu0
        %v1292 = vld [vmem:[%s377] sm:$0xff]
        %v1293 = vld [vmem:[%s377 + $0x8] sm:$0xff]
        %v1294 = vld [vmem:[%s377 + $0x10] sm:$0xff]
        %v1295 = vld [vmem:[%s377 + $0x18] sm:$0xff]
        %v1296 = vld [vmem:[%s377 + $0x20] sm:$0xff]
        %v1297 = vld [vmem:[%s377 + $0x28] sm:$0xff]
        %v1298 = vld [vmem:[%s377 + $0x30] sm:$0xff]
        %v1299 = vld [vmem:[%s377 + $0x38] sm:$0xff]
        %v1300 = vsel %vm528, 1, 0
        %v1301 = vsel %vm529, 1, 0
        %v1302 = vsel %vm530, 1, 0
        %v1303 = vsel %vm531, 1, 0
        %v1304 = vsel %vm532, 1, 0
        %v1305 = vsel %vm533, 1, 0
        %v1306 = vsel %vm534, 1, 0
        %v1307 = vsel %vm535, 1, 0
        %vm1308 = vcmp.eq.s32.totalorder %v1300, 1
        %vm1309 = vcmp.eq.s32.totalorder %v1301, 1
        %vm1310 = vcmp.eq.s32.totalorder %v1302, 1
        %vm1311 = vcmp.eq.s32.totalorder %v1303, 1
        %vm1312 = vcmp.eq.s32.totalorder %v1304, 1
        %vm1313 = vcmp.eq.s32.totalorder %v1305, 1
        %vm1314 = vcmp.eq.s32.totalorder %v1306, 1
        %vm1315 = vcmp.eq.s32.totalorder %v1307, 1
        %v1316 = vsel %vm1308, 0.0, %v1289
        %v1317 = vsel %vm1309, 0.0, %v1262
        %v1318 = vsel %vm1310, 0.0, %v1265
        %v1319 = vsel %vm1311, 0.0, %v1270
        %v1320 = vsel %vm1312, 0.0, %v1273
        %v1321 = vsel %vm1313, 0.0, %v1278
        %v1322 = vsel %vm1314, 0.0, %v1281
        %v1323 = vsel %vm1315, 0.0, %v1286
        %v1324 = vadd.f32 %v1292, %v1316
        %v1325 = vadd.f32 %v1293, %v1317
        %v1326 = vadd.f32 %v1294, %v1318
        %v1327 = vadd.f32 %v1295, %v1319
        %v1328 = vadd.f32 %v1296, %v1320
        %v1329 = vadd.f32 %v1297, %v1321
        %v1330 = vadd.f32 %v1298, %v1322
        %v1331 = vadd.f32 %v1299, %v1323
        %1332 = vst [vmem:[%s377] sm:$0xff] %v1324
        %1333 = vst [vmem:[%s377 + $0x8] sm:$0xff] %v1325
        %1334 = vst [vmem:[%s377 + $0x10] sm:$0xff] %v1326
        %1335 = vst [vmem:[%s377 + $0x18] sm:$0xff] %v1327
        %1336 = vst [vmem:[%s377 + $0x20] sm:$0xff] %v1328
        %1337 = vst [vmem:[%s377 + $0x28] sm:$0xff] %v1329
        %1338 = vst [vmem:[%s377 + $0x30] sm:$0xff] %v1330
        %1339 = vst [vmem:[%s377 + $0x38] sm:$0xff] %v1331
        %s1340 = scalar_lea.vmem [#allocation8], 64
        %v1341 = vld [vmem:[%s1340] sm:$0xf]
        %v1342 = vld [vmem:[%s1340 + $0x4] sm:$0xf]
        %v1343 = vld [vmem:[%s1340 + $0x8] sm:$0xf]
        %v1344 = vld [vmem:[%s1340 + $0xc] sm:$0xf]
        %v1345 = vld [vmem:[%s1340 + $0x10] sm:$0xf]
        %v1346 = vld [vmem:[%s1340 + $0x14] sm:$0xf]
        %v1347 = vld [vmem:[%s1340 + $0x18] sm:$0xf]
        %v1348 = vld [vmem:[%s1340 + $0x1c] sm:$0xf]
        %v1349 = vld [vmem:[%s1340 + $0x20] sm:$0xf]
        %v1350 = vld [vmem:[%s1340 + $0x24] sm:$0xf]
        %v1351 = vld [vmem:[%s1340 + $0x28] sm:$0xf]
        %v1352 = vld [vmem:[%s1340 + $0x2c] sm:$0xf]
        %v1353 = vld [vmem:[%s1340 + $0x30] sm:$0xf]
        %v1354 = vld [vmem:[%s1340 + $0x34] sm:$0xf]
        %v1355 = vld [vmem:[%s1340 + $0x38] sm:$0xf]
        %v1356 = vld [vmem:[%s1340 + $0x3c] sm:$0xf]
        %s1357 = scalar_lea.vmem [#allocation8], 128
        %v1358 = vld [vmem:[%s1357] sm:$0xf]
        %v1359 = vld [vmem:[%s1357 + $0x4] sm:$0xf]
        %v1360 = vld [vmem:[%s1357 + $0x8] sm:$0xf]
        %v1361 = vld [vmem:[%s1357 + $0xc] sm:$0xf]
        %v1362 = vld [vmem:[%s1357 + $0x10] sm:$0xf]
        %v1363 = vld [vmem:[%s1357 + $0x14] sm:$0xf]
        %v1364 = vld [vmem:[%s1357 + $0x18] sm:$0xf]
        %v1365 = vld [vmem:[%s1357 + $0x1c] sm:$0xf]
        %v1366 = vld [vmem:[%s1357 + $0x20] sm:$0xf]
        %v1367 = vld [vmem:[%s1357 + $0x24] sm:$0xf]
        %v1368 = vld [vmem:[%s1357 + $0x28] sm:$0xf]
        %v1369 = vld [vmem:[%s1357 + $0x2c] sm:$0xf]
        %v1370 = vld [vmem:[%s1357 + $0x30] sm:$0xf]
        %v1371 = vld [vmem:[%s1357 + $0x34] sm:$0xf]
        %v1372 = vld [vmem:[%s1357 + $0x38] sm:$0xf]
        %v1373 = vld [vmem:[%s1357 + $0x3c] sm:$0xf]
        %v1390 = vunpack.c.l.b16 %v1358
        %v1391 = vunpack.c.l.b16 %v1359
        %v1392 = vunpack.c.l.b16 %v1360
        %v1393 = vunpack.c.l.b16 %v1361
        %v1394 = vunpack.c.l.b16 %v1362
        %v1395 = vunpack.c.l.b16 %v1363
        %v1396 = vunpack.c.l.b16 %v1364
        %v1397 = vunpack.c.l.b16 %v1365
        %v1398 = vunpack.c.l.b16 %v1366
        %v1399 = vunpack.c.l.b16 %v1367
        %v1400 = vunpack.c.l.b16 %v1368
        %v1401 = vunpack.c.l.b16 %v1369
        %v1402 = vunpack.c.l.b16 %v1370
        %v1403 = vunpack.c.l.b16 %v1371
        %v1404 = vunpack.c.l.b16 %v1372
        %v1405 = vunpack.c.l.b16 %v1373
        %v1406 = vpack.c.b16 %v1391, %v1390
        %v1407 = vpack.c.b16 %v1393, %v1392
        %v1408 = vpack.c.b16 %v1395, %v1394
        %v1409 = vpack.c.b16 %v1397, %v1396
        %v1410 = vpack.c.b16 %v1399, %v1398
        %v1411 = vpack.c.b16 %v1401, %v1400
        %v1412 = vpack.c.b16 %v1403, %v1402
        %v1413 = vpack.c.b16 %v1405, %v1404
        %1422 = vmatprep.subr.bf16.mxu0 0
        %1423 = vmatpush1.bf16.msra.mxu0 %v1413
        %1424 = vmatprep.subr.bf16.mxu0 0
        %1425 = vmatpush1.bf16.msra.mxu0 %v1412
        %1426 = vmatprep.subr.bf16.mxu0 0
        %1427 = vmatpush1.bf16.msra.mxu0 %v1411
        %1428 = vmatprep.subr.bf16.mxu0 0
        %1429 = vmatpush1.bf16.msra.mxu0 %v1410
        %1430 = vmatprep.subr.bf16.mxu0 0
        %1431 = vmatpush1.bf16.msra.mxu0 %v1409
        %1432 = vmatprep.subr.bf16.mxu0 0
        %1433 = vmatpush1.bf16.msra.mxu0 %v1408
        %1434 = vmatprep.subr.bf16.mxu0 0
        %1435 = vmatpush1.bf16.msra.mxu0 %v1407
        %1436 = vmatprep.subr.bf16.mxu0 0
        %1437 = vmatpush1.bf16.msra.mxu0 %v1406
        %1438 = vmatprep.subr.bf16.mxu0 0
        %1439 = vmatpush2.bf16.msra.mxu0 0
        %1440 = vmatprep.subr.bf16.mxu0 0
        %1441 = vmatpush2.bf16.msra.mxu0 0
        %1442 = vmatprep.subr.bf16.mxu0 0
        %1443 = vmatpush2.bf16.msra.mxu0 0
        %1444 = vmatprep.subr.bf16.mxu0 0
        %1445 = vmatpush2.bf16.msra.mxu0 0
        %1446 = vmatprep.subr.bf16.mxu0 0
        %1447 = vmatpush2.bf16.msra.mxu0 0
        %1448 = vmatprep.subr.bf16.mxu0 0
        %1449 = vmatpush2.bf16.msra.mxu0 0
        %1450 = vmatprep.subr.bf16.mxu0 0
        %1451 = vmatpush2.bf16.msra.mxu0 0
        %1452 = vmatprep.subr.bf16.mxu0 0
        %1453 = vmatpush2.bf16.msra.mxu0 0
        %1454 = vmatprep.mubr.bf16.mxu0 0
        %1455 = vmatmul.mubr.bf16.gmra.mxu0 %v907
        %v1456 = vpop.f32.mrf.mxu0
        %v1457 = vadd.f32 0.0, %v1456
        %v1458 = vpop.f32.mrf.mxu0
        %v1459 = vpop.f32.mrf.mxu0
        %v1460 = vadd.f32 0.0, %v1459
        %v1461 = vpop.f32.mrf.mxu0
        %1462 = vmatprep.mubr.bf16.mxu0 0
        %1463 = vmatmul.mubr.bf16.gmra.mxu0 %v909
        %v1464 = vpop.f32.mrf.mxu0
        %v1465 = vadd.f32 0.0, %v1464
        %v1466 = vpop.f32.mrf.mxu0
        %v1467 = vpop.f32.mrf.mxu0
        %v1468 = vadd.f32 0.0, %v1467
        %v1469 = vpop.f32.mrf.mxu0
        %1470 = vmatprep.mubr.bf16.mxu0 0
        %1471 = vmatmul.mubr.bf16.gmra.mxu0 %v911
        %v1472 = vpop.f32.mrf.mxu0
        %v1473 = vadd.f32 0.0, %v1472
        %v1474 = vpop.f32.mrf.mxu0
        %v1475 = vpop.f32.mrf.mxu0
        %v1476 = vadd.f32 0.0, %v1475
        %v1477 = vpop.f32.mrf.mxu0
        %1478 = vmatprep.mubr.bf16.mxu0 0
        %1479 = vmatmul.mubr.bf16.gmra.mxu0 %v913
        %v1480 = vpop.f32.mrf.mxu0
        %v1481 = vadd.f32 0.0, %v1480
        %v1482 = vpop.f32.mrf.mxu0
        %v1483 = vpop.f32.mrf.mxu0
        %v1484 = vadd.f32 0.0, %v1483
        %v1485 = vpop.f32.mrf.mxu0
        %1486 = vdwg.mxu0
        %v1503 = vunpack.c.l.b16 %v1341
        %v1504 = vunpack.c.l.b16 %v1342
        %v1505 = vunpack.c.l.b16 %v1343
        %v1506 = vunpack.c.l.b16 %v1344
        %v1507 = vunpack.c.l.b16 %v1345
        %v1508 = vunpack.c.l.b16 %v1346
        %v1509 = vunpack.c.l.b16 %v1347
        %v1510 = vunpack.c.l.b16 %v1348
        %v1511 = vunpack.c.l.b16 %v1349
        %v1512 = vunpack.c.l.b16 %v1350
        %v1513 = vunpack.c.l.b16 %v1351
        %v1514 = vunpack.c.l.b16 %v1352
        %v1515 = vunpack.c.l.b16 %v1353
        %v1516 = vunpack.c.l.b16 %v1354
        %v1517 = vunpack.c.l.b16 %v1355
        %v1518 = vunpack.c.l.b16 %v1356
        %v1519 = vpack.c.b16 %v1504, %v1503
        %v1520 = vpack.c.b16 %v1506, %v1505
        %v1521 = vpack.c.b16 %v1508, %v1507
        %v1522 = vpack.c.b16 %v1510, %v1509
        %v1523 = vpack.c.b16 %v1512, %v1511
        %v1524 = vpack.c.b16 %v1514, %v1513
        %v1525 = vpack.c.b16 %v1516, %v1515
        %v1526 = vpack.c.b16 %v1518, %v1517
        %1535 = vmatprep.subr.bf16.mxu0 0
        %1536 = vmatpush1.bf16.msra.mxu0 %v1526
        %1537 = vmatprep.subr.bf16.mxu0 0
        %1538 = vmatpush1.bf16.msra.mxu0 %v1525
        %1539 = vmatprep.subr.bf16.mxu0 0
        %1540 = vmatpush1.bf16.msra.mxu0 %v1524
        %1541 = vmatprep.subr.bf16.mxu0 0
        %1542 = vmatpush1.bf16.msra.mxu0 %v1523
        %1543 = vmatprep.subr.bf16.mxu0 0
        %1544 = vmatpush1.bf16.msra.mxu0 %v1522
        %1545 = vmatprep.subr.bf16.mxu0 0
        %1546 = vmatpush1.bf16.msra.mxu0 %v1521
        %1547 = vmatprep.subr.bf16.mxu0 0
        %1548 = vmatpush1.bf16.msra.mxu0 %v1520
        %1549 = vmatprep.subr.bf16.mxu0 0
        %1550 = vmatpush1.bf16.msra.mxu0 %v1519
        %1551 = vmatprep.subr.bf16.mxu0 0
        %1552 = vmatpush2.bf16.msra.mxu0 0
        %1553 = vmatprep.subr.bf16.mxu0 0
        %1554 = vmatpush2.bf16.msra.mxu0 0
        %1555 = vmatprep.subr.bf16.mxu0 0
        %1556 = vmatpush2.bf16.msra.mxu0 0
        %1557 = vmatprep.subr.bf16.mxu0 0
        %1558 = vmatpush2.bf16.msra.mxu0 0
        %1559 = vmatprep.subr.bf16.mxu0 0
        %1560 = vmatpush2.bf16.msra.mxu0 0
        %1561 = vmatprep.subr.bf16.mxu0 0
        %1562 = vmatpush2.bf16.msra.mxu0 0
        %1563 = vmatprep.subr.bf16.mxu0 0
        %1564 = vmatpush2.bf16.msra.mxu0 0
        %1565 = vmatprep.subr.bf16.mxu0 0
        %1566 = vmatpush2.bf16.msra.mxu0 0
        %1567 = vmatprep.mubr.bf16.mxu0 0
        %1568 = vmatmul.mubr.bf16.gmra.mxu0 %v681
        %v1569 = vpop.f32.mrf.mxu0
        %v1570 = vadd.f32 %v1457, %v1569
        %v1571 = vpop.f32.mrf.mxu0
        %v1572 = vpop.f32.mrf.mxu0
        %v1573 = vadd.f32 %v1460, %v1572
        %v1574 = vpop.f32.mrf.mxu0
        %1575 = vmatprep.mubr.bf16.mxu0 0
        %1576 = vmatmul.mubr.bf16.gmra.mxu0 %v683
        %v1577 = vpop.f32.mrf.mxu0
        %v1578 = vadd.f32 %v1465, %v1577
        %v1579 = vpop.f32.mrf.mxu0
        %v1580 = vpop.f32.mrf.mxu0
        %v1581 = vadd.f32 %v1468, %v1580
        %v1582 = vpop.f32.mrf.mxu0
        %1583 = vmatprep.mubr.bf16.mxu0 0
        %1584 = vmatmul.mubr.bf16.gmra.mxu0 %v685
        %v1585 = vpop.f32.mrf.mxu0
        %v1586 = vadd.f32 %v1473, %v1585
        %v1587 = vpop.f32.mrf.mxu0
        %v1588 = vpop.f32.mrf.mxu0
        %v1589 = vadd.f32 %v1476, %v1588
        %v1590 = vpop.f32.mrf.mxu0
        %1591 = vmatprep.mubr.bf16.mxu0 0
        %1592 = vmatmul.mubr.bf16.gmra.mxu0 %v687
        %v1593 = vpop.f32.mrf.mxu0
        %v1594 = vadd.f32 %v1481, %v1593
        %v1595 = vpop.f32.mrf.mxu0
        %v1596 = vpop.f32.mrf.mxu0
        %v1597 = vadd.f32 %v1484, %v1596
        %v1598 = vpop.f32.mrf.mxu0
        %1599 = vdwg.mxu0
        %v1600 = vld [vmem:[#allocation8] sm:$0xf]
        %v1601 = vld [vmem:[#allocation8 + $0x4] sm:$0xf]
        %v1602 = vld [vmem:[#allocation8 + $0x8] sm:$0xf]
        %v1603 = vld [vmem:[#allocation8 + $0xc] sm:$0xf]
        %v1604 = vld [vmem:[#allocation8 + $0x10] sm:$0xf]
        %v1605 = vld [vmem:[#allocation8 + $0x14] sm:$0xf]
        %v1606 = vld [vmem:[#allocation8 + $0x18] sm:$0xf]
        %v1607 = vld [vmem:[#allocation8 + $0x1c] sm:$0xf]
        %v1608 = vld [vmem:[#allocation8 + $0x20] sm:$0xf]
        %v1609 = vld [vmem:[#allocation8 + $0x24] sm:$0xf]
        %v1610 = vld [vmem:[#allocation8 + $0x28] sm:$0xf]
        %v1611 = vld [vmem:[#allocation8 + $0x2c] sm:$0xf]
        %v1612 = vld [vmem:[#allocation8 + $0x30] sm:$0xf]
        %v1613 = vld [vmem:[#allocation8 + $0x34] sm:$0xf]
        %v1614 = vld [vmem:[#allocation8 + $0x38] sm:$0xf]
        %v1615 = vld [vmem:[#allocation8 + $0x3c] sm:$0xf]
        %v1632 = vunpack.c.l.b16 %v1600
        %v1633 = vunpack.c.l.b16 %v1601
        %v1634 = vunpack.c.l.b16 %v1602
        %v1635 = vunpack.c.l.b16 %v1603
        %v1636 = vunpack.c.l.b16 %v1604
        %v1637 = vunpack.c.l.b16 %v1605
        %v1638 = vunpack.c.l.b16 %v1606
        %v1639 = vunpack.c.l.b16 %v1607
        %v1640 = vunpack.c.l.b16 %v1608
        %v1641 = vunpack.c.l.b16 %v1609
        %v1642 = vunpack.c.l.b16 %v1610
        %v1643 = vunpack.c.l.b16 %v1611
        %v1644 = vunpack.c.l.b16 %v1612
        %v1645 = vunpack.c.l.b16 %v1613
        %v1646 = vunpack.c.l.b16 %v1614
        %v1647 = vunpack.c.l.b16 %v1615
        %v1648 = vpack.c.b16 %v1633, %v1632
        %v1649 = vpack.c.b16 %v1635, %v1634
        %v1650 = vpack.c.b16 %v1637, %v1636
        %v1651 = vpack.c.b16 %v1639, %v1638
        %v1652 = vpack.c.b16 %v1641, %v1640
        %v1653 = vpack.c.b16 %v1643, %v1642
        %v1654 = vpack.c.b16 %v1645, %v1644
        %v1655 = vpack.c.b16 %v1647, %v1646
        %1664 = vmatprep.subr.bf16.mxu0 0
        %1665 = vmatpush1.bf16.msra.mxu0 %v1655
        %1666 = vmatprep.subr.bf16.mxu0 0
        %1667 = vmatpush1.bf16.msra.mxu0 %v1654
        %1668 = vmatprep.subr.bf16.mxu0 0
        %1669 = vmatpush1.bf16.msra.mxu0 %v1653
        %1670 = vmatprep.subr.bf16.mxu0 0
        %1671 = vmatpush1.bf16.msra.mxu0 %v1652
        %1672 = vmatprep.subr.bf16.mxu0 0
        %1673 = vmatpush1.bf16.msra.mxu0 %v1651
        %1674 = vmatprep.subr.bf16.mxu0 0
        %1675 = vmatpush1.bf16.msra.mxu0 %v1650
        %1676 = vmatprep.subr.bf16.mxu0 0
        %1677 = vmatpush1.bf16.msra.mxu0 %v1649
        %1678 = vmatprep.subr.bf16.mxu0 0
        %1679 = vmatpush1.bf16.msra.mxu0 %v1648
        %1680 = vmatprep.subr.bf16.mxu0 0
        %1681 = vmatpush2.bf16.msra.mxu0 0
        %1682 = vmatprep.subr.bf16.mxu0 0
        %1683 = vmatpush2.bf16.msra.mxu0 0
        %1684 = vmatprep.subr.bf16.mxu0 0
        %1685 = vmatpush2.bf16.msra.mxu0 0
        %1686 = vmatprep.subr.bf16.mxu0 0
        %1687 = vmatpush2.bf16.msra.mxu0 0
        %1688 = vmatprep.subr.bf16.mxu0 0
        %1689 = vmatpush2.bf16.msra.mxu0 0
        %1690 = vmatprep.subr.bf16.mxu0 0
        %1691 = vmatpush2.bf16.msra.mxu0 0
        %1692 = vmatprep.subr.bf16.mxu0 0
        %1693 = vmatpush2.bf16.msra.mxu0 0
        %1694 = vmatprep.subr.bf16.mxu0 0
        %1695 = vmatpush2.bf16.msra.mxu0 0
        %1696 = vmatprep.mubr.bf16.mxu0 0
        %1697 = vmatmul.mubr.bf16.gmra.mxu0 %v907
        %v1698 = vpop.f32.mrf.mxu0
        %v1699 = vadd.f32 0.0, %v1698
        %v1700 = vpop.f32.mrf.mxu0
        %v1701 = vpop.f32.mrf.mxu0
        %v1702 = vadd.f32 0.0, %v1701
        %v1703 = vpop.f32.mrf.mxu0
        %1704 = vmatprep.mubr.bf16.mxu0 0
        %1705 = vmatmul.mubr.bf16.gmra.mxu0 %v909
        %v1706 = vpop.f32.mrf.mxu0
        %v1707 = vadd.f32 0.0, %v1706
        %v1708 = vpop.f32.mrf.mxu0
        %v1709 = vpop.f32.mrf.mxu0
        %v1710 = vadd.f32 0.0, %v1709
        %v1711 = vpop.f32.mrf.mxu0
        %1712 = vmatprep.mubr.bf16.mxu0 0
        %1713 = vmatmul.mubr.bf16.gmra.mxu0 %v911
        %v1714 = vpop.f32.mrf.mxu0
        %v1715 = vadd.f32 0.0, %v1714
        %v1716 = vpop.f32.mrf.mxu0
        %v1717 = vpop.f32.mrf.mxu0
        %v1718 = vadd.f32 0.0, %v1717
        %v1719 = vpop.f32.mrf.mxu0
        %1720 = vmatprep.mubr.bf16.mxu0 0
        %1721 = vmatmul.mubr.bf16.gmra.mxu0 %v913
        %v1722 = vpop.f32.mrf.mxu0
        %v1723 = vadd.f32 0.0, %v1722
        %v1724 = vpop.f32.mrf.mxu0
        %v1725 = vpop.f32.mrf.mxu0
        %v1726 = vadd.f32 0.0, %v1725
        %v1727 = vpop.f32.mrf.mxu0
        %1728 = vdwg.mxu0
        %v1729 = vsel %vm1308, 0.0, %v1726
        %v1730 = vsel %vm1309, 0.0, %v1699
        %v1731 = vsel %vm1310, 0.0, %v1702
        %v1732 = vsel %vm1311, 0.0, %v1707
        %v1733 = vsel %vm1312, 0.0, %v1710
        %v1734 = vsel %vm1313, 0.0, %v1715
        %v1735 = vsel %vm1314, 0.0, %v1718
        %v1736 = vsel %vm1315, 0.0, %v1723
        %v1737 = vadd.f32 %v1570, %v1729
        %v1738 = vadd.f32 %v1573, %v1730
        %v1739 = vadd.f32 %v1578, %v1731
        %v1740 = vadd.f32 %v1581, %v1732
        %v1741 = vadd.f32 %v1586, %v1733
        %v1742 = vadd.f32 %v1589, %v1734
        %v1743 = vadd.f32 %v1594, %v1735
        %v1744 = vadd.f32 %v1597, %v1736
        %v1745 = vld [vmem:[%s377] sm:$0xff]
        %v1746 = vld [vmem:[%s377 + $0x8] sm:$0xff]
        %v1747 = vld [vmem:[%s377 + $0x10] sm:$0xff]
        %v1748 = vld [vmem:[%s377 + $0x18] sm:$0xff]
        %v1749 = vld [vmem:[%s377 + $0x20] sm:$0xff]
        %v1750 = vld [vmem:[%s377 + $0x28] sm:$0xff]
        %v1751 = vld [vmem:[%s377 + $0x30] sm:$0xff]
        %v1752 = vld [vmem:[%s377 + $0x38] sm:$0xff]
        %v1753 = vrot.slane %v1737, 7
        %v1754 = vrot.slane %v1738, 7
        %v1755 = vrot.slane %v1739, 7
        %v1756 = vrot.slane %v1740, 7
        %v1757 = vrot.slane %v1741, 7
        %v1758 = vrot.slane %v1742, 7
        %v1759 = vrot.slane %v1743, 7
        %v1760 = vrot.slane %v1744, 7
        %vm1761 = vcmp.lt.s32.totalorder %v520, 1
        %v1762 = vsel %vm1761, %v1759, %v1760
        %v1763 = vsel %vm1761, %v1758, %v1759
        %v1764 = vsel %vm1761, %v1757, %v1758
        %v1765 = vsel %vm1761, %v1756, %v1757
        %v1766 = vsel %vm1761, %v1755, %v1756
        %v1767 = vsel %vm1761, %v1754, %v1755
        %v1768 = vsel %vm1761, %v1753, %v1754
        %v1769 = vsel %vm1761, %v1760, %v1753
        %v1770 = vsel %vm632, 1, 0
        %v1771 = vsel %vm633, 1, 0
        %v1772 = vsel %vm634, 1, 0
        %v1773 = vsel %vm635, 1, 0
        %v1774 = vsel %vm636, 1, 0
        %v1775 = vsel %vm637, 1, 0
        %v1776 = vsel %vm638, 1, 0
        %v1777 = vsel %vm639, 1, 0
        %vm1778 = vcmp.eq.s32.totalorder %v1770, 1
        %vm1779 = vcmp.eq.s32.totalorder %v1771, 1
        %vm1780 = vcmp.eq.s32.totalorder %v1772, 1
        %vm1781 = vcmp.eq.s32.totalorder %v1773, 1
        %vm1782 = vcmp.eq.s32.totalorder %v1774, 1
        %vm1783 = vcmp.eq.s32.totalorder %v1775, 1
        %vm1784 = vcmp.eq.s32.totalorder %v1776, 1
        %vm1785 = vcmp.eq.s32.totalorder %v1777, 1
        %v1786 = vsel %vm1778, 0.0, %v1769
        %v1787 = vsel %vm1779, 0.0, %v1768
        %v1788 = vsel %vm1780, 0.0, %v1767
        %v1789 = vsel %vm1781, 0.0, %v1766
        %v1790 = vsel %vm1782, 0.0, %v1765
        %v1791 = vsel %vm1783, 0.0, %v1764
        %v1792 = vsel %vm1784, 0.0, %v1763
        %v1793 = vsel %vm1785, 0.0, %v1762
        %v1794 = vadd.f32 %v1745, %v1786
        %v1795 = vadd.f32 %v1746, %v1787
        %v1796 = vadd.f32 %v1747, %v1788
        %v1797 = vadd.f32 %v1748, %v1789
        %v1798 = vadd.f32 %v1749, %v1790
        %v1799 = vadd.f32 %v1750, %v1791
        %v1800 = vadd.f32 %v1751, %v1792
        %v1801 = vadd.f32 %v1752, %v1793
        %1802 = vst [vmem:[%s377] sm:$0xff] %v1794
        %1803 = vst [vmem:[%s377 + $0x8] sm:$0xff] %v1795
        %1804 = vst [vmem:[%s377 + $0x10] sm:$0xff] %v1796
        %1805 = vst [vmem:[%s377 + $0x18] sm:$0xff] %v1797
        %1806 = vst [vmem:[%s377 + $0x20] sm:$0xff] %v1798
        %1807 = vst [vmem:[%s377 + $0x28] sm:$0xff] %v1799
        %1808 = vst [vmem:[%s377 + $0x30] sm:$0xff] %v1800
        %1809 = vst [vmem:[%s377 + $0x38] sm:$0xff] %v1801
        %s1810 = sand.u32 %s199, 1
        %s1811 = scalar_lea.sflag [#allocation4], %s1810
        %s1812 = sand.u32 %s199, 1
        %s1813 = smul.addr %s1812, 64
        %s1814 = scalar_lea.vmem [#allocation10], %s1813
        // Predicated region
        $region57: #{tpu_custom_call.1} parent=39 // pred_check
          %p1815 = pneg %p209
        $region58: #{tpu_custom_call.1} parent=39 // pred_check_branch
          %1817 = sbr.rel (%p1815) target = $region60
        $region59: #{tpu_custom_call.1} parent=39 // pred_region
          %s1818 = sadd.s32 %s31, %s32
          %s1819 = smul.u32 8, %s1818
          %s1821 = ssub.s32 1024, 1024
          %1822 = vsyncadd %s1811, %s1821
          %s1823 = sadd.s32 %s33, %s1819
          %s1824 = smul.addr %s1823, 128
          %s1825 = scalar_lea.hbm %s5, %s1824
          %s1826 = sshll.u32 %s1814, 4
          %s1827 = int_to_ptr.vmem [resolvable:$true] %s1826
          %1832 = dma.vmem_to_hbm [thread:$0]  %s1827, 1024, %s1825, %s1811, 128, 128, 8
        $region60: #{tpu_custom_call.1} parent=39 // pred_fallthru
          _
      $region40: #{tpu_custom_call.1} parent=5 // pred_fallthru
        _
      %p1833 = scmp.le.s32.totalorder 2, %s21
      // Predicated region
      $region61: #{tpu_custom_call.1} parent=5 // pred_check
        %p1834 = pneg %p1833
      $region62: #{tpu_custom_call.1} parent=5 // pred_check_branch
        %1836 = sbr.rel (%p1834) target = $region64
      $region63: #{tpu_custom_call.1} parent=5 // pred_region
        %s1837 = ssub.s32 %s21, 2
        // Predicated region
        $region65: #{tpu_custom_call.1} parent=63 // pred_check
          %p1838 = pneg %p215
        $region66: #{tpu_custom_call.1} parent=63 // pred_check_branch
          %1840 = sbr.rel (%p1838) target = $region68
        $region67: #{tpu_custom_call.1} parent=63 // pred_region
          %s1841 = sand.u32 %s200, 1
          %s1842 = scalar_lea.sflag [#allocation4], %s1841
          %s1843 = sand.u32 %s200, 1
          %s1844 = smul.addr %s1843, 64
          %s1845 = scalar_lea.vmem [#allocation10], %s1844
          %1846 = dma.done %s1842, 1024
        $region68: #{tpu_custom_call.1} parent=63 // pred_fallthru
          _
      $region64: #{tpu_custom_call.1} parent=5 // pred_fallthru
        _
    $region6: #{tpu_custom_call.1} parent=1 // loop_footer
      %s25 = sadd.s32 1, %s21
    $region7: #{tpu_custom_call.1} parent=1 // loop_footer_branch
      %20 = sbr.rel target = $region3
    $region8: #{tpu_custom_call.1} parent=1 // loop_exit
      _
    %1847 = vsyncpa [#allocation3], 1
    %s1848 = scalar_lea.sflag [#allocation3], 1
    %1849 = vsyncpa %s1848, 1
    %1850 = vsyncpa [#allocation6], 1
    %s1851 = scalar_lea.sflag [#allocation6], 1
    %1852 = vsyncpa %s1851, 1
    %1853 = vsyncpa [#allocation9], 1
    %1854 = vsyncpa [#allocation4], 1
    %s1855 = scalar_lea.sflag [#allocation4], 1
    %1856 = vsyncpa %s1855, 1

</llo_original>
